<compile_context>
chip_gen: v7x
topology: tpu7x:2x2x1
jax: 0.10.0
libtpu: 0.0.40
codegen_flags: <defaults>
</compile_context>

<pallas_src>
import jax
import jax.numpy as jnp
from jax.experimental import pallas as pl
from jax.experimental.pallas import tpu as pltpu


# --------------------------------------------------------------------------
# helpers
# --------------------------------------------------------------------------
def _round_up(x, m):
    return ((x + m - 1) // m) * m


def _tpu_kind():
    try:
        return jax.devices()[0].device_kind.lower()
    except Exception:
        return ""


def _pick_k_tile(k_pad, tk_limit):
    """Largest multiple of 128 <= tk_limit that divides k_pad (k_pad % 128 == 0)."""
    tk = max(128, (int(tk_limit) // 128) * 128)
    tk = min(tk, k_pad)
    while tk >= 128:
        if k_pad % tk == 0:
            return tk
        tk -= 128
    return 128


# --------------------------------------------------------------------------
# kernel
# --------------------------------------------------------------------------
def _mlp_kernel(x_ref, w1_ref, b1_ref, w2_ref, b2_ref, w3_ref, b3_ref,
                o_ref, acc_ref):
    """One (batch_tile, k_tile) step of the streamed layer-1 matmul."""
    k = pl.program_id(1)

    @pl.when(k == 0)
    def _():
        acc_ref[...] = jnp.zeros_like(acc_ref)

    # Streamed layer-1 partial product: (bt, tk) @ (tk, H1), f32 accumulate.
    # x arrives in its HBM dtype (e.g. f32) and is cast in-kernel (hides under DMA).
    acc_ref[...] += jnp.dot(x_ref[...].astype(w1_ref.dtype), w1_ref[...],
                            preferred_element_type=jnp.float32)

    # Layers 2/3 only on the final K step.
    @pl.when(k == pl.num_programs(1) - 1)
    def _():
        h1 = jnp.maximum(acc_ref[...] + b1_ref[...], 0.0)            # bias + ReLU
        h2 = jnp.dot(h1.astype(w2_ref.dtype), w2_ref[...],
                     preferred_element_type=jnp.float32) + b2_ref[...]
        h2 = jnp.maximum(h2, 0.0)                                     # ReLU
        out = jnp.dot(h2.astype(w3_ref.dtype), w3_ref[...],
                      preferred_element_type=jnp.float32) + b3_ref[...]
        o_ref[...] = out.astype(o_ref.dtype)                          # lane-dense (padded N)


# --------------------------------------------------------------------------
# one-time parameter preparation (do this OUTSIDE the per-call hot path)
# --------------------------------------------------------------------------
def prepare_params(w1, b1, w2, b2, w3, b3, *, compute_dtype=jnp.bfloat16):
    """Cast weights to the compute dtype, pad tiny dims, reshape biases.

    w1: (D_in, H1), w2: (H1, H2), w3: (H2, D_out); biases (N,) or (1, N).
    Returns a dict of device arrays ready for `neuralnetwork_forward`.
    """
    cd = compute_dtype
    f32 = jnp.float32
    d_in, h1 = w1.shape
    h2 = w2.shape[1]
    d_out = w3.shape[1]

    d_in_p = _round_up(d_in, 128)
    n_pad = _round_up(max(d_out, 128), 128)          # lane-dense output width

    if d_in_p == d_in:
        w1_c = w1.astype(cd)
    else:  # zero-pad K (exact for the matmul)
        w1_c = jnp.zeros((d_in_p, h1), cd).at[:d_in, :].set(w1.astype(cd))
    w3_p = jnp.zeros((h2, n_pad), cd).at[:, :d_out].set(w3.astype(cd))
    b3_p = jnp.zeros((1, n_pad), f32).at[:, :d_out].set(
        b3.reshape(1, d_out).astype(f32))

    return dict(
        w1=w1_c, b1=b1.reshape(1, h1).astype(f32),
        w2=w2.astype(cd), b2=b2.reshape(1, h2).astype(f32),
        w3=w3_p, b3=b3_p, d_in=d_in, d_out=d_out)


# --------------------------------------------------------------------------
# forward
# --------------------------------------------------------------------------
def neuralnetwork_forward(x, params, *, batch_tile=None, k_tile=None):
    """Forward pass of Neuralnetwork.  x: (B, D_in).  Returns (B, D_out) f32."""
    w1, b1 = params["w1"], params["b1"]
    w2, b2 = params["w2"], params["b2"]
    w3, b3 = params["w3"], params["b3"]
    d_in, d_out = params["d_in"], params["d_out"]

    B, d_in_x = x.shape
    assert d_in_x == d_in, "input feature dim mismatch"
    K_pad, H1 = w1.shape
    H2 = w2.shape[1]
    N_pad = w3.shape[1]
    f32 = jnp.float32

    # ---------------- generation-aware budgets ----------------
    kind = _tpu_kind()
    is_v7x = "v7" in kind
    vmem_phys = (64 << 20) if is_v7x else (128 << 20)
    vmem_cap = (48 << 20) if is_v7x else (96 << 20)
    k_cap = 16384 if is_v7x else 32768
    bt_cap = 256 if is_v7x else 512

    # ---------------- batch tile ----------------
    B_al = _round_up(B, 8)
    if batch_tile is not None:
        bt = min(_round_up(batch_tile, 8), B_al)
    elif is_v7x and B_al >= 16:
        # >= 2 batch tiles so both TensorCores get work on v7x.
        bt = min(_round_up((B_al + 1) // 2, 8), bt_cap)
    else:
        # Single TC: one batch tile as large as allowed -> W1 streamed once.
        bt = min(B_al, bt_cap)
    B_pad = _round_up(B_al, bt)

    # ---------------- K tile (fits VMEM, divides padded D_in) ----------------
    x_sz = jnp.dtype(x.dtype).itemsize
    w_sz = jnp.dtype(w1.dtype).itemsize
    resident_bytes = 2 * ((H1 * H2 + H2 * N_pad) * w_sz + (H1 + H2 + N_pad) * 4)
    out_bytes = 2 * bt * N_pad * 4
    acc_bytes = bt * H1 * 4
    per_col = 2 * (bt * x_sz + H1 * w_sz)          # double-buffered bytes / K column
    stream_budget = max(int(0.70 * vmem_phys) - resident_bytes - out_bytes - acc_bytes,
                        128 * per_col)
    tk_limit = min(stream_budget // per_col, k_cap, K_pad)
    if k_tile is not None:
        tk_limit = min(tk_limit, k_tile)
    tk = _pick_k_tile(K_pad, tk_limit)

    # ---------------- pad x only when actually needed ----------------
    if (B_pad != B) or (K_pad != d_in):
        x_in = jnp.zeros((B_pad, K_pad), x.dtype).at[:B, :d_in].set(x)
    else:
        x_in = x

    # ---------------- VMEM request (generation-aware clamp) ----------------
    stream_bytes = tk * per_col
    need = stream_bytes + resident_bytes + out_bytes + acc_bytes
    vmem_bytes = min(max(int(1.25 * need), 32 << 20), vmem_cap)

    grid = (B_pad // bt, K_pad // tk)

    out_padded = pl.pallas_call(
        _mlp_kernel,
        out_shape=jax.ShapeDtypeStruct((B_pad, N_pad), f32),
        grid_spec=pltpu.PrefetchScalarGridSpec(
            num_scalar_prefetch=0,
            grid=grid,
            in_specs=[
                pl.BlockSpec((bt, tk), lambda i, k: (i, k)),      # x slab (streamed)
                pl.BlockSpec((tk, H1), lambda i, k: (k, 0)),      # W1 slab (streamed)
                pl.BlockSpec((1, H1), lambda i, k: (0, 0)),       # b1 (resident)
                pl.BlockSpec((H1, H2), lambda i, k: (0, 0)),      # W2 (resident)
                pl.BlockSpec((1, H2), lambda i, k: (0, 0)),       # b2 (resident)
                pl.BlockSpec((H2, N_pad), lambda i, k: (0, 0)),   # W3 (resident, N-padded)
                pl.BlockSpec((1, N_pad), lambda i, k: (0, 0)),    # b3 (resident, N-padded)
            ],
            out_specs=pl.BlockSpec((bt, N_pad), lambda i, k: (i, 0)),
            scratch_shapes=[pltpu.VMEM((bt, H1), jnp.float32)],   # layer-1 f32 accumulator
        ),
        compiler_params=pltpu.CompilerParams(
            dimension_semantics=("parallel", "arbitrary"),
            vmem_limit_bytes=int(vmem_bytes),
        ),
    )(x_in, w1, b1, w2, b2, w3, b3)

    return out_padded[:B, :d_out]


# --------------------------------------------------------------------------
# demo / correctness check
# --------------------------------------------------------------------------
if __name__ == "__main__":
    # Small, module-consistent demo shapes (the real model uses
    # input_size=393216; the same K-streamed kernel handles that scale with
    # larger auto-chosen k_tile / batch_tile).
    batch = 256
    input_size = 1024
    hidden_size1 = 256
    hidden_size2 = 128
    output_size = 2          # geolocation-style output (lat/lon)

    key = jax.random.PRNGKey(0)
    kx, k1, k2, k3, kb1, kb2, kb3 = jax.random.split(key, 7)

    x = jax.random.normal(kx, (batch, input_size), dtype=jnp.float32)

    # Deterministic PyTorch-like uniform fan-in init, stored transposed (in, out).
    def init_linear(kw, kb, fan_in, fan_out):
        bound = 1.0 / jnp.sqrt(jnp.float32(fan_in))
        w = jax.random.uniform(kw, (fan_in, fan_out), jnp.float32, -bound, bound)
        b = jax.random.uniform(kb, (1, fan_out), jnp.float32, -bound, bound)
        return w, b

    w1, b1 = init_linear(k1, kb1, input_size, hidden_size1)
    w2, b2 = init_linear(k2, kb2, hidden_size1, hidden_size2)
    w3, b3 = init_linear(k3, kb3, hidden_size2, output_size)

    # One-time weight prep (bf16 cast + padding) — cached across calls.
    params = prepare_params(w1, b1, w2, b2, w3, b3)

    # Overrides chosen to exercise both grid axes (2 batch tiles x 2 K steps).
    out = neuralnetwork_forward(x, params, batch_tile=128, k_tile=512)
    out = jax.block_until_ready(out)

    # Pure-JAX reference with matching bf16 input/activation rounding
    # (f32 accumulate), so tolerances stay tight.
    cd = jnp.bfloat16
    def _c(a):
        return a.astype(cd).astype(jnp.float32)
    ref = jnp.maximum(_c(x) @ _c(w1) + b1, 0.0)
    ref = jnp.maximum(_c(ref) @ _c(w2) + b2, 0.0)
    ref = _c(ref) @ _c(w3) + b3

    assert out.shape == (batch, output_size)
    assert jnp.allclose(out, ref, atol=2e-2, rtol=2e-2), (
        float(jnp.max(jnp.abs(out - ref))))

    print("KERNEL_OK")
</pallas_src>

<mosaic_0001>
module attributes {stable_mosaic.version = 11 : i64} {
  func.func @_mlp_kernel(%arg0: i32, %arg1: i32, %arg2: memref<128x512xf32, #tpu.memory_space<vmem>>, %arg3: memref<512x256xbf16, #tpu.memory_space<vmem>>, %arg4: memref<1x256xf32, #tpu.memory_space<vmem>>, %arg5: memref<256x128xbf16, #tpu.memory_space<vmem>>, %arg6: memref<1x128xf32, #tpu.memory_space<vmem>>, %arg7: memref<128x128xbf16, #tpu.memory_space<vmem>>, %arg8: memref<1x128xf32, #tpu.memory_space<vmem>>, %arg9: memref<128x128xf32, #tpu.memory_space<vmem>>, %arg10: memref<128x256xf32, #tpu.memory_space<vmem>>) attributes {dimension_semantics = [#tpu.dimension_semantics<parallel>, #tpu.dimension_semantics<arbitrary>], iteration_bounds = array<i64: 2, 2>, scalar_prefetch = 0 : i64, scratch_operands = 1 : i64, tpu.core_type = #tpu.core_type<tc>, window_params = [{transform_indices = @transform_0, window_bounds = array<i64: 128, 512>}, {transform_indices = @transform_1, window_bounds = array<i64: 512, 256>}, {pipeline_mode = #tpu.pipeline_mode<synchronous>, transform_indices = @transform_2, window_bounds = array<i64: 1, 256>}, {pipeline_mode = #tpu.pipeline_mode<synchronous>, transform_indices = @transform_3, window_bounds = array<i64: 256, 128>}, {pipeline_mode = #tpu.pipeline_mode<synchronous>, transform_indices = @transform_4, window_bounds = array<i64: 1, 128>}, {pipeline_mode = #tpu.pipeline_mode<synchronous>, transform_indices = @transform_5, window_bounds = array<i64: 128, 128>}, {pipeline_mode = #tpu.pipeline_mode<synchronous>, transform_indices = @transform_6, window_bounds = array<i64: 1, 128>}, {transform_indices = @transform_7, window_bounds = array<i64: 128, 128>}]} {
    %c0_i32 = arith.constant 0 : i32
    %0 = arith.cmpi eq, %arg1, %c0_i32 : i32
    %1 = arith.extui %0 : i1 to i32
    %c0_i32_0 = arith.constant 0 : i32
    %2 = arith.cmpi ne, %1, %c0_i32_0 : i32
    scf.if %2 {
      %cst_9 = arith.constant 0.000000e+00 : f32
      %13 = vector.broadcast %cst_9 : f32 to vector<128x256xf32>
      %c0_10 = arith.constant 0 : index
      %c0_11 = arith.constant 0 : index
      %14 = vector.load %arg10[%c0_10, %c0_11] : memref<128x256xf32, #tpu.memory_space<vmem>>, vector<128x256xf32>
      tpu.vector_store %arg10[%c0_10, %c0_11], %13 {strides = array<i32>} : memref<128x256xf32, #tpu.memory_space<vmem>>, vector<128x256xf32>,
    } else {
    }
    %c0 = arith.constant 0 : index
    %c0_1 = arith.constant 0 : index
    %3 = vector.load %arg10[%c0, %c0_1] : memref<128x256xf32, #tpu.memory_space<vmem>>, vector<128x256xf32>
    %c0_2 = arith.constant 0 : index
    %c0_3 = arith.constant 0 : index
    %4 = vector.load %arg2[%c0_2, %c0_3] : memref<128x512xf32, #tpu.memory_space<vmem>>, vector<128x512xf32>
    %5 = arith.truncf %4 : vector<128x512xf32> to vector<128x512xbf16>
    %c0_4 = arith.constant 0 : index
    %c0_5 = arith.constant 0 : index
    %6 = vector.load %arg3[%c0_4, %c0_5] : memref<512x256xbf16, #tpu.memory_space<vmem>>, vector<512x256xbf16>
    %cst = arith.constant dense<0.000000e+00> : vector<128x256xf32>
    %7 = tpu.matmul %5, %6, %cst {dimension_numbers = #tpu.dot_dimension_numbers<[1], [0], [0], [1], [0, 0, 1, 1], [], []>} : vector<128x512xbf16>, vector<512x256xbf16>, vector<128x256xf32> -> vector<128x256xf32>
    %8 = arith.addf %3, %7 : vector<128x256xf32>
    %c0_6 = arith.constant 0 : index
    %c0_7 = arith.constant 0 : index
    %9 = vector.load %arg10[%c0_6, %c0_7] : memref<128x256xf32, #tpu.memory_space<vmem>>, vector<128x256xf32>
    tpu.vector_store %arg10[%c0_6, %c0_7], %8 {strides = array<i32>} : memref<128x256xf32, #tpu.memory_space<vmem>>, vector<128x256xf32>,
    %c1_i32 = arith.constant 1 : i32
    %10 = arith.cmpi eq, %arg1, %c1_i32 : i32
    %11 = arith.extui %10 : i1 to i32
    %c0_i32_8 = arith.constant 0 : i32
    %12 = arith.cmpi ne, %11, %c0_i32_8 : i32
    scf.if %12 {
      %c0_9 = arith.constant 0 : index
      %c0_10 = arith.constant 0 : index
      %13 = vector.load %arg10[%c0_9, %c0_10] : memref<128x256xf32, #tpu.memory_space<vmem>>, vector<128x256xf32>
      %c0_11 = arith.constant 0 : index
      %c0_12 = arith.constant 0 : index
      %14 = vector.load %arg4[%c0_11, %c0_12] : memref<1x256xf32, #tpu.memory_space<vmem>>, vector<1x256xf32>
      %15 = vector.broadcast %14 : vector<1x256xf32> to vector<128x256xf32>
      %16 = arith.addf %13, %15 : vector<128x256xf32>
      %cst_13 = arith.constant 0.000000e+00 : f32
      %17 = vector.broadcast %cst_13 : f32 to vector<128x256xf32>
      %18 = arith.maximumf %16, %17 : vector<128x256xf32>
      %19 = arith.truncf %18 : vector<128x256xf32> to vector<128x256xbf16>
      %c0_14 = arith.constant 0 : index
      %c0_15 = arith.constant 0 : index
      %20 = vector.load %arg5[%c0_14, %c0_15] : memref<256x128xbf16, #tpu.memory_space<vmem>>, vector<256x128xbf16>
      %cst_16 = arith.constant dense<0.000000e+00> : vector<128x128xf32>
      %21 = tpu.matmul %19, %20, %cst_16 {dimension_numbers = #tpu.dot_dimension_numbers<[1], [0], [0], [1], [0, 0, 1, 1], [], []>} : vector<128x256xbf16>, vector<256x128xbf16>, vector<128x128xf32> -> vector<128x128xf32>
      %c0_17 = arith.constant 0 : index
      %c0_18 = arith.constant 0 : index
      %22 = vector.load %arg6[%c0_17, %c0_18] : memref<1x128xf32, #tpu.memory_space<vmem>>, vector<1x128xf32>
      %23 = vector.broadcast %22 : vector<1x128xf32> to vector<128x128xf32>
      %24 = arith.addf %21, %23 : vector<128x128xf32>
      %cst_19 = arith.constant 0.000000e+00 : f32
      %25 = vector.broadcast %cst_19 : f32 to vector<128x128xf32>
      %26 = arith.maximumf %24, %25 : vector<128x128xf32>
      %27 = arith.truncf %26 : vector<128x128xf32> to vector<128x128xbf16>
      %c0_20 = arith.constant 0 : index
      %c0_21 = arith.constant 0 : index
      %28 = vector.load %arg7[%c0_20, %c0_21] : memref<128x128xbf16, #tpu.memory_space<vmem>>, vector<128x128xbf16>
      %cst_22 = arith.constant dense<0.000000e+00> : vector<128x128xf32>
      %29 = tpu.matmul %27, %28, %cst_22 {dimension_numbers = #tpu.dot_dimension_numbers<[1], [0], [0], [1], [0, 0, 1, 1], [], []>} : vector<128x128xbf16>, vector<128x128xbf16>, vector<128x128xf32> -> vector<128x128xf32>
      %c0_23 = arith.constant 0 : index
      %c0_24 = arith.constant 0 : index
      %30 = vector.load %arg8[%c0_23, %c0_24] : memref<1x128xf32, #tpu.memory_space<vmem>>, vector<1x128xf32>
      %31 = vector.broadcast %30 : vector<1x128xf32> to vector<128x128xf32>
      %32 = arith.addf %29, %31 : vector<128x128xf32>
      %c0_25 = arith.constant 0 : index
      %c0_26 = arith.constant 0 : index
      %33 = vector.load %arg9[%c0_25, %c0_26] : memref<128x128xf32, #tpu.memory_space<vmem>>, vector<128x128xf32>
      tpu.vector_store %arg9[%c0_25, %c0_26], %32 {strides = array<i32>} : memref<128x128xf32, #tpu.memory_space<vmem>>, vector<128x128xf32>,
    } else {
    }
    return
  }
  func.func @transform_0(%arg0: i32, %arg1: i32) -> (i32, i32) {
    %c0_i32 = arith.constant 0 : i32
    return %arg0, %arg1 : i32, i32
  }
  func.func @transform_1(%arg0: i32, %arg1: i32) -> (i32, i32) {
    %c0_i32 = arith.constant 0 : i32
    %c0_i32_0 = arith.constant 0 : i32
    return %arg1, %c0_i32 : i32, i32
  }
  func.func @transform_2(%arg0: i32, %arg1: i32) -> (i32, i32) {
    %c0_i32 = arith.constant 0 : i32
    %c0_i32_0 = arith.constant 0 : i32
    %c0_i32_1 = arith.constant 0 : i32
    return %c0_i32, %c0_i32_0 : i32, i32
  }
  func.func @transform_3(%arg0: i32, %arg1: i32) -> (i32, i32) {
    %c0_i32 = arith.constant 0 : i32
    %c0_i32_0 = arith.constant 0 : i32
    %c0_i32_1 = arith.constant 0 : i32
    return %c0_i32, %c0_i32_0 : i32, i32
  }
  func.func @transform_4(%arg0: i32, %arg1: i32) -> (i32, i32) {
    %c0_i32 = arith.constant 0 : i32
    %c0_i32_0 = arith.constant 0 : i32
    %c0_i32_1 = arith.constant 0 : i32
    return %c0_i32, %c0_i32_0 : i32, i32
  }
  func.func @transform_5(%arg0: i32, %arg1: i32) -> (i32, i32) {
    %c0_i32 = arith.constant 0 : i32
    %c0_i32_0 = arith.constant 0 : i32
    %c0_i32_1 = arith.constant 0 : i32
    return %c0_i32, %c0_i32_0 : i32, i32
  }
  func.func @transform_6(%arg0: i32, %arg1: i32) -> (i32, i32) {
    %c0_i32 = arith.constant 0 : i32
    %c0_i32_0 = arith.constant 0 : i32
    %c0_i32_1 = arith.constant 0 : i32
    return %c0_i32, %c0_i32_0 : i32, i32
  }
  func.func @transform_7(%arg0: i32, %arg1: i32) -> (i32, i32) {
    %c0_i32 = arith.constant 0 : i32
    %c0_i32_0 = arith.constant 0 : i32
    return %arg0, %c0_i32 : i32, i32
  }
}

</mosaic_0001>

<llo_original>
// kernel: tpu_custom_call.1
$region0: #{tpu_custom_call.1}
  #allocation0 [shape = 'u32[]', space=smem, size = 0x4, offset = 0x4, fixed_abs, tag = 'smem constant byte address 0x4 - core index']
  #allocation1 [shape = 'u32[144,128]{1,0:T(1,128)}', space=vmem, size = 0x12000, scoped, tag = 'internal scratch']
  #allocation2 [shape = 'f32[128,256]{1,0:T(8,128)}', space=vmem, size = 0x20000, scoped, tag = 'scratch operand']
  %s0 = inlined_call_operand.hbm [shape: f32[256,1024], index: 0, kind: input, shape index: {}]
  %s1 = inlined_call_operand.hbm [shape: bf16[1024,256], index: 1, kind: input, shape index: {}]
  %s2 = inlined_call_operand.vmem [shape: f32[1,256], index: 2, kind: input, shape index: {}]
  %s3 = inlined_call_operand.hbm [shape: bf16[256,128], index: 3, kind: input, shape index: {}]
  %s4 = inlined_call_operand.vmem [shape: f32[1,128], index: 4, kind: input, shape index: {}]
  %s5 = inlined_call_operand.hbm [shape: bf16[128,128], index: 5, kind: input, shape index: {}]
  %s6 = inlined_call_operand.vmem [shape: f32[1,128], index: 6, kind: input, shape index: {}]
  %s7 = inlined_call_operand.hbm [shape: f32[256,128], index: 7, kind: output, shape index: {}]
  %s8 = sld [smem:[#allocation0]]
  $region85: #{tpu_custom_call.1} parent=0
    _
  %s10 = ssub.s32 1, %s8
  %s11 = scalar_select 0, %s10, %s8
  $region1: #{tpu_custom_call.1} parent=0
    #allocation3 [shape = 'u8[524288]{0}', space=vmem, size = 0x80000, scoped, tag = 'input window, operand 0']
    #allocation4 [shape = 's32[2]{0}', space=sflag, size = 0x8, scoped, tag = 'scoped memory for tpu_custom_call.1']
    #allocation5 [shape = 's32[2]{0}', space=sflag, size = 0x8, scoped, tag = 'scoped memory for tpu_custom_call.1']
    #allocation6 [shape = 'u8[524288]{0}', space=vmem, size = 0x80000, scoped, tag = 'input window, operand 1']
    #allocation7 [shape = 's32[2]{0}', space=sflag, size = 0x8, scoped, tag = 'scoped memory for tpu_custom_call.1']
    #allocation8 [shape = 'u8[65536]{0}', space=vmem, size = 0x10000, scoped, tag = 'input window, operand 3, single buffered']
    #allocation9 [shape = 'u8[32768]{0}', space=vmem, size = 0x8000, scoped, tag = 'input window, operand 5, single buffered']
    #allocation10 [shape = 's32[1]{0}', space=sflag, size = 0x4, scoped, tag = 'scoped memory for tpu_custom_call.1']
    #allocation11 [shape = 'u8[131072]{0}', space=vmem, size = 0x20000, scoped, tag = 'output window, operand 0']
    %12 = vsyncpa [#allocation4], 0
    %s13 = scalar_lea.sflag [#allocation4], 1
    %14 = vsyncpa %s13, 0
    %15 = vsyncpa [#allocation7], 0
    %s16 = scalar_lea.sflag [#allocation7], 1
    %17 = vsyncpa %s16, 0
    %18 = vsyncpa [#allocation10], 0
    %19 = vsyncpa [#allocation5], 0
    %s20 = scalar_lea.sflag [#allocation5], 1
    %21 = vsyncpa %s20, 0
    loop: start=0, step=1, limit=6
    $region2: #{tpu_custom_call.1} parent=1 // loop_pre_header
      _
    $region3: #{tpu_custom_call.1} parent=1 // loop_header
      %s23 = sphi 0, %s27
      %p24 = scmp.ge.s32.totalorder %s23, 6
      %s30 = sphi 0, %s42
      %s31 = sphi 0, %s38
      %s32 = sphi 0, %s30
      %s33 = sphi 0, %s31
      %s34 = sphi 0, %s32
      %s35 = sphi 0, %s33
      %s47 = sphi 0, %s49
      %s50 = sphi 0, %s47
      %s51 = sphi 0, %s50
      %s67 = sphi 0, %s51
      %s73 = sphi 0, %s75
      %s76 = sphi 0, %s73
      %s77 = sphi 0, %s76
      %s93 = sphi 0, %s77
      %s97 = sphi 0, %s97
      %s99 = sphi 0, %s97
      %s100 = sphi 0, %s99
      %s114 = sphi 0, %s100
      %s118 = sphi 0, %s118
      %s120 = sphi 0, %s118
      %s121 = sphi 0, %s120
      %s135 = sphi 0, %s121
      %s139 = sphi 0, %s139
      %s141 = sphi 0, %s139
      %s142 = sphi 0, %s141
      %s156 = sphi 0, %s142
      %s160 = sphi 0, %s160
      %s162 = sphi 0, %s160
      %s163 = sphi 0, %s162
      %s177 = sphi 0, %s163
      %s181 = sphi 0, %s181
      %s183 = sphi 0, %s181
      %s184 = sphi 0, %s183
      %s198 = sphi 0, %s184
      %s204 = sphi 0, %s206
      %s207 = sphi 0, %s204
      %s208 = sphi 0, %s207
      %s224 = sphi 0, %s208
    $region4: #{tpu_custom_call.1} parent=1 // loop_header_branch
      %26 = sbr.rel (%p24) target = $region8
    $region5: #{tpu_custom_call.1} parent=1 // loop_body
      %s28 = ssub.s32 %s23, 1
      %s29 = ssub.s32 %s23, 2
      %s36 = sadd.s32 1, %s31
      %p37 = scmp.ge.s32.totalorder %s36, 2
      %s38 = scalar_select %p37, 0, %s36
      %s39 = sadd.s32 1, %s30
      %s40 = scalar_select %p37, %s39, %s30
      %p41 = scmp.ge.s32.totalorder %s40, 2
      %s42 = scalar_select %p41, 0, %s40
      %s43 = ssub.s32 %s30, %s42
      %s44 = ssub.s32 %s31, %s38
      %s45 = sor.u32 %s43, %s44
      %p46 = scmp.eq.s32.totalorder %s45, 0
      %s48 = sadd.s32 %s47, 1
      %s49 = scalar_select %p46, %s47, %s48
      %p52 = pneg %p46
      %p53 = scmp.eq.s32.totalorder %s23, 3
      %p54 = por %p52, %p53
      %p55 = scmp.ne.s32.totalorder %s47, %s50
      %p56 = scmp.eq.s32.totalorder %s23, 0
      %p57 = por %p55, %p56
      %p58 = scmp.ne.s32.totalorder %s47, %s50
      %p59 = scmp.eq.s32.totalorder %s28, 3
      %p60 = por %p58, %p59
      %p61 = scmp.ne.s32.totalorder %s50, %s51
      %p62 = scmp.eq.s32.totalorder %s28, 0
      %p63 = por %p61, %p62
      %p64 = scmp.ne.s32.totalorder %s50, %s51
      %p65 = scmp.eq.s32.totalorder %s29, 3
      %p66 = por %p64, %p65
      %p68 = scmp.ne.s32.totalorder %s51, %s67
      %p69 = scmp.eq.s32.totalorder %s29, 0
      %p70 = por %p68, %p69
      %s71 = ssub.s32 %s31, %s38
      %p72 = scmp.eq.s32.totalorder %s71, 0
      %s74 = sadd.s32 %s73, 1
      %s75 = scalar_select %p72, %s73, %s74
      %p78 = pneg %p72
      %p79 = scmp.eq.s32.totalorder %s23, 3
      %p80 = por %p78, %p79
      %p81 = scmp.ne.s32.totalorder %s73, %s76
      %p82 = scmp.eq.s32.totalorder %s23, 0
      %p83 = por %p81, %p82
      %p84 = scmp.ne.s32.totalorder %s73, %s76
      %p85 = scmp.eq.s32.totalorder %s28, 3
      %p86 = por %p84, %p85
      %p87 = scmp.ne.s32.totalorder %s76, %s77
      %p88 = scmp.eq.s32.totalorder %s28, 0
      %p89 = por %p87, %p88
      %p90 = scmp.ne.s32.totalorder %s76, %s77
      %p91 = scmp.eq.s32.totalorder %s29, 3
      %p92 = por %p90, %p91
      %p94 = scmp.ne.s32.totalorder %s77, %s93
      %p95 = scmp.eq.s32.totalorder %s29, 0
      %p96 = por %p94, %p95
      %s98 = sadd.s32 %s97, 1
      %p101 = scmp.eq.s32.totalorder %s23, 3
      %p102 = scmp.ne.s32.totalorder %s97, %s99
      %p103 = scmp.eq.s32.totalorder %s23, 0
      %p104 = por %p102, %p103
      %p105 = scmp.ne.s32.totalorder %s97, %s99
      %p106 = scmp.eq.s32.totalorder %s28, 3
      %p107 = por %p105, %p106
      %p108 = scmp.ne.s32.totalorder %s99, %s100
      %p109 = scmp.eq.s32.totalorder %s28, 0
      %p110 = por %p108, %p109
      %p111 = scmp.ne.s32.totalorder %s99, %s100
      %p112 = scmp.eq.s32.totalorder %s29, 3
      %p113 = por %p111, %p112
      %p115 = scmp.ne.s32.totalorder %s100, %s114
      %p116 = scmp.eq.s32.totalorder %s29, 0
      %p117 = por %p115, %p116
      %s119 = sadd.s32 %s118, 1
      %p122 = scmp.eq.s32.totalorder %s23, 3
      %p123 = scmp.ne.s32.totalorder %s118, %s120
      %p124 = scmp.eq.s32.totalorder %s23, 0
      %p125 = por %p123, %p124
      %p126 = scmp.ne.s32.totalorder %s118, %s120
      %p127 = scmp.eq.s32.totalorder %s28, 3
      %p128 = por %p126, %p127
      %p129 = scmp.ne.s32.totalorder %s120, %s121
      %p130 = scmp.eq.s32.totalorder %s28, 0
      %p131 = por %p129, %p130
      %p132 = scmp.ne.s32.totalorder %s120, %s121
      %p133 = scmp.eq.s32.totalorder %s29, 3
      %p134 = por %p132, %p133
      %p136 = scmp.ne.s32.totalorder %s121, %s135
      %p137 = scmp.eq.s32.totalorder %s29, 0
      %p138 = por %p136, %p137
      %s140 = sadd.s32 %s139, 1
      %p143 = scmp.eq.s32.totalorder %s23, 3
      %p144 = scmp.ne.s32.totalorder %s139, %s141
      %p145 = scmp.eq.s32.totalorder %s23, 0
      %p146 = por %p144, %p145
      %p147 = scmp.ne.s32.totalorder %s139, %s141
      %p148 = scmp.eq.s32.totalorder %s28, 3
      %p149 = por %p147, %p148
      %p150 = scmp.ne.s32.totalorder %s141, %s142
      %p151 = scmp.eq.s32.totalorder %s28, 0
      %p152 = por %p150, %p151
      %p153 = scmp.ne.s32.totalorder %s141, %s142
      %p154 = scmp.eq.s32.totalorder %s29, 3
      %p155 = por %p153, %p154
      %p157 = scmp.ne.s32.totalorder %s142, %s156
      %p158 = scmp.eq.s32.totalorder %s29, 0
      %p159 = por %p157, %p158
      %s161 = sadd.s32 %s160, 1
      %p164 = scmp.eq.s32.totalorder %s23, 3
      %p165 = scmp.ne.s32.totalorder %s160, %s162
      %p166 = scmp.eq.s32.totalorder %s23, 0
      %p167 = por %p165, %p166
      %p168 = scmp.ne.s32.totalorder %s160, %s162
      %p169 = scmp.eq.s32.totalorder %s28, 3
      %p170 = por %p168, %p169
      %p171 = scmp.ne.s32.totalorder %s162, %s163
      %p172 = scmp.eq.s32.totalorder %s28, 0
      %p173 = por %p171, %p172
      %p174 = scmp.ne.s32.totalorder %s162, %s163
      %p175 = scmp.eq.s32.totalorder %s29, 3
      %p176 = por %p174, %p175
      %p178 = scmp.ne.s32.totalorder %s163, %s177
      %p179 = scmp.eq.s32.totalorder %s29, 0
      %p180 = por %p178, %p179
      %s182 = sadd.s32 %s181, 1
      %p185 = scmp.eq.s32.totalorder %s23, 3
      %p186 = scmp.ne.s32.totalorder %s181, %s183
      %p187 = scmp.eq.s32.totalorder %s23, 0
      %p188 = por %p186, %p187
      %p189 = scmp.ne.s32.totalorder %s181, %s183
      %p190 = scmp.eq.s32.totalorder %s28, 3
      %p191 = por %p189, %p190
      %p192 = scmp.ne.s32.totalorder %s183, %s184
      %p193 = scmp.eq.s32.totalorder %s28, 0
      %p194 = por %p192, %p193
      %p195 = scmp.ne.s32.totalorder %s183, %s184
      %p196 = scmp.eq.s32.totalorder %s29, 3
      %p197 = por %p195, %p196
      %p199 = scmp.ne.s32.totalorder %s184, %s198
      %p200 = scmp.eq.s32.totalorder %s29, 0
      %p201 = por %p199, %p200
      %s202 = ssub.s32 %s30, %s42
      %p203 = scmp.eq.s32.totalorder %s202, 0
      %s205 = sadd.s32 %s204, 1
      %s206 = scalar_select %p203, %s204, %s205
      %p209 = pneg %p203
      %p210 = scmp.eq.s32.totalorder %s23, 3
      %p211 = por %p209, %p210
      %p212 = scmp.ne.s32.totalorder %s204, %s207
      %p213 = scmp.eq.s32.totalorder %s23, 0
      %p214 = por %p212, %p213
      %p215 = scmp.ne.s32.totalorder %s204, %s207
      %p216 = scmp.eq.s32.totalorder %s28, 3
      %p217 = por %p215, %p216
      %p218 = scmp.ne.s32.totalorder %s207, %s208
      %p219 = scmp.eq.s32.totalorder %s28, 0
      %p220 = por %p218, %p219
      %p221 = scmp.ne.s32.totalorder %s207, %s208
      %p222 = scmp.eq.s32.totalorder %s29, 3
      %p223 = por %p221, %p222
      %p225 = scmp.ne.s32.totalorder %s208, %s224
      %p226 = scmp.eq.s32.totalorder %s29, 0
      %p227 = por %p225, %p226
      %p228 = scmp.le.s32.totalorder 1, %s23
      %p229 = scmp.lt.s32.totalorder %s23, 5
      %p230 = pnand %p228, %p229
      %p231 = pneg %p230
      // Predicated region
      $region9: #{tpu_custom_call.1} parent=5 // pred_check
        _
      $region10: #{tpu_custom_call.1} parent=5 // pred_check_branch
        %233 = sbr.rel (%p230) target = $region12
      $region11: #{tpu_custom_call.1} parent=5 // pred_region
        %s234 = ssub.s32 %s23, 1
        // Predicated region
        $region13: #{tpu_custom_call.1} parent=11 // pred_check
          %p235 = pneg %p110
        $region14: #{tpu_custom_call.1} parent=11 // pred_check_branch
          %237 = sbr.rel (%p235) target = $region16
        $region15: #{tpu_custom_call.1} parent=11 // pred_region
          _
        $region16: #{tpu_custom_call.1} parent=11 // pred_fallthru
          _
        // Predicated region
        $region17: #{tpu_custom_call.1} parent=11 // pred_check
          %p238 = pneg %p131
        $region18: #{tpu_custom_call.1} parent=11 // pred_check_branch
          %240 = sbr.rel (%p238) target = $region20
        $region19: #{tpu_custom_call.1} parent=11 // pred_region
          %s242 = ssub.s32 2048, 2048
          %243 = vsyncadd [#allocation7], %s242
          %s244 = sshll.u32 [#allocation8], 4
          %s245 = int_to_ptr.vmem [resolvable:$true] %s244
          %250 = dma.hbm_to_vmem [thread:$0]  %s3, 2048, %s245, [#allocation7], 64, 64, 4
        $region20: #{tpu_custom_call.1} parent=11 // pred_fallthru
          _
        // Predicated region
        $region21: #{tpu_custom_call.1} parent=11 // pred_check
          %p251 = pneg %p152
        $region22: #{tpu_custom_call.1} parent=11 // pred_check_branch
          %253 = sbr.rel (%p251) target = $region24
        $region23: #{tpu_custom_call.1} parent=11 // pred_region
          _
        $region24: #{tpu_custom_call.1} parent=11 // pred_fallthru
          _
        // Predicated region
        $region25: #{tpu_custom_call.1} parent=11 // pred_check
          %p254 = pneg %p173
        $region26: #{tpu_custom_call.1} parent=11 // pred_check_branch
          %256 = sbr.rel (%p254) target = $region28
        $region27: #{tpu_custom_call.1} parent=11 // pred_region
          %s258 = ssub.s32 1024, 1024
          %259 = vsyncadd [#allocation10], %s258
          %s260 = sshll.u32 [#allocation9], 4
          %s261 = int_to_ptr.vmem [resolvable:$true] %s260
          %266 = dma.hbm_to_vmem [thread:$0]  %s5, 1024, %s261, [#allocation10], 64, 64, 4
        $region28: #{tpu_custom_call.1} parent=11 // pred_fallthru
          _
        // Predicated region
        $region29: #{tpu_custom_call.1} parent=11 // pred_check
          %p267 = pneg %p194
        $region30: #{tpu_custom_call.1} parent=11 // pred_check_branch
          %269 = sbr.rel (%p267) target = $region32
        $region31: #{tpu_custom_call.1} parent=11 // pred_region
          _
        $region32: #{tpu_custom_call.1} parent=11 // pred_fallthru
          _
      $region12: #{tpu_custom_call.1} parent=5 // pred_fallthru
        _
      %p270 = scmp.lt.s32.totalorder %s23, 4
      // Predicated region
      $region33: #{tpu_custom_call.1} parent=5 // pred_check
        %p271 = pneg %p270
      $region34: #{tpu_custom_call.1} parent=5 // pred_check_branch
        %273 = sbr.rel (%p271) target = $region36
      $region35: #{tpu_custom_call.1} parent=5 // pred_region
        // Predicated region
        $region37: #{tpu_custom_call.1} parent=35 // pred_check
          %p274 = pneg %p57
        $region38: #{tpu_custom_call.1} parent=35 // pred_check_branch
          %276 = sbr.rel (%p274) target = $region40
        $region39: #{tpu_custom_call.1} parent=35 // pred_region
          %s277 = sand.u32 %s47, 1
          %s278 = scalar_lea.sflag [#allocation4], %s277
          %s279 = sand.u32 %s47, 1
          %s280 = smul.addr %s279, 512
          %s281 = scalar_lea.vmem [#allocation3], %s280
          %s282 = smul.u32 16, %s30
          %s283 = smul.u32 4, %s31
          %s285 = ssub.s32 8192, 8192
          %286 = vsyncadd %s278, %s285
          %s287 = smul.addr %s282, 8
          %s288 = sadd.s32 %s283, %s287
          %s289 = smul.addr %s288, 128
          %s290 = scalar_lea.hbm %s0, %s289
          %s291 = sshll.u32 %s281, 4
          %s292 = int_to_ptr.vmem [resolvable:$true] %s291
          %297 = dma.hbm_to_vmem [thread:$0]  %s290, 8192, %s292, %s278, 1024, 512, 32
        $region40: #{tpu_custom_call.1} parent=35 // pred_fallthru
          _
        // Predicated region
        $region41: #{tpu_custom_call.1} parent=35 // pred_check
          %p298 = pneg %p83
        $region42: #{tpu_custom_call.1} parent=35 // pred_check_branch
          %300 = sbr.rel (%p298) target = $region44
        $region43: #{tpu_custom_call.1} parent=35 // pred_region
          %s301 = sand.u32 %s23, 1
          %s302 = scalar_lea.sflag [#allocation7], %s301
          %s303 = sand.u32 %s73, 1
          %s304 = smul.addr %s303, 512
          %s305 = scalar_lea.vmem [#allocation6], %s304
          %s306 = smul.u32 64, %s31
          %s308 = ssub.s32 8192, 8192
          %309 = vsyncadd %s302, %s308
          %s310 = smul.addr %s306, 2
          %s311 = smul.addr %s310, 64
          %s312 = scalar_lea.hbm %s1, %s311
          %s313 = sshll.u32 %s305, 4
          %s314 = int_to_ptr.vmem [resolvable:$true] %s313
          %319 = dma.hbm_to_vmem [thread:$0]  %s312, 8192, %s314, %s302, 128, 128, 8
        $region44: #{tpu_custom_call.1} parent=35 // pred_fallthru
          _
      $region36: #{tpu_custom_call.1} parent=5 // pred_fallthru
        _
      %p320 = scmp.le.s32.totalorder 1, %s23
      %p321 = scmp.lt.s32.totalorder %s23, 5
      %p322 = pnand %p320, %p321
      %p323 = pneg %p322
      // Predicated region
      $region45: #{tpu_custom_call.1} parent=5 // pred_check
        _
      $region46: #{tpu_custom_call.1} parent=5 // pred_check_branch
        %325 = sbr.rel (%p322) target = $region48
      $region47: #{tpu_custom_call.1} parent=5 // pred_region
        %s326 = ssub.s32 %s23, 1
        %s327 = sand.u32 %s50, 1
        %s328 = scalar_lea.sflag [#allocation4], %s327
        %s329 = sand.u32 %s50, 1
        %s330 = smul.addr %s329, 512
        %s331 = scalar_lea.vmem [#allocation3], %s330
        // Predicated region
        $region49: #{tpu_custom_call.1} parent=47 // pred_check
          %p332 = pneg %p63
        $region50: #{tpu_custom_call.1} parent=47 // pred_check_branch
          %334 = sbr.rel (%p332) target = $region52
        $region51: #{tpu_custom_call.1} parent=47 // pred_region
          %335 = dma.done %s328, 8192
        $region52: #{tpu_custom_call.1} parent=47 // pred_fallthru
          _
        %s336 = sand.u32 %s28, 1
        %s337 = scalar_lea.sflag [#allocation7], %s336
        %s338 = sand.u32 %s76, 1
        %s339 = smul.addr %s338, 512
        %s340 = scalar_lea.vmem [#allocation6], %s339
        // Predicated region
        $region53: #{tpu_custom_call.1} parent=47 // pred_check
          %p341 = pneg %p89
        $region54: #{tpu_custom_call.1} parent=47 // pred_check_branch
          %343 = sbr.rel (%p341) target = $region56
        $region55: #{tpu_custom_call.1} parent=47 // pred_region
          %344 = dma.done %s337, 8192
        $region56: #{tpu_custom_call.1} parent=47 // pred_fallthru
          _
        // Predicated region
        $region57: #{tpu_custom_call.1} parent=47 // pred_check
          %p345 = pneg %p131
        $region58: #{tpu_custom_call.1} parent=47 // pred_check_branch
          %347 = sbr.rel (%p345) target = $region60
        $region59: #{tpu_custom_call.1} parent=47 // pred_region
          %348 = dma.done [#allocation7], 2048
        $region60: #{tpu_custom_call.1} parent=47 // pred_fallthru
          _
        // Predicated region
        $region61: #{tpu_custom_call.1} parent=47 // pred_check
          %p349 = pneg %p173
        $region62: #{tpu_custom_call.1} parent=47 // pred_check_branch
          %351 = sbr.rel (%p349) target = $region64
        $region63: #{tpu_custom_call.1} parent=47 // pred_region
          %352 = dma.done [#allocation10], 1024
        $region64: #{tpu_custom_call.1} parent=47 // pred_fallthru
          _
        %s353 = sand.u32 %s50, 1
        %s354 = scalar_lea.sflag [#allocation4], %s353
        %s355 = sand.u32 %s50, 1
        %s356 = smul.addr %s355, 512
        %s357 = scalar_lea.vmem [#allocation3], %s356
        %p358 = pneg %p63
        %p359 = pneg %p60
        %s360 = sand.u32 %s28, 1
        %s361 = scalar_lea.sflag [#allocation7], %s360
        %s362 = sand.u32 %s76, 1
        %s363 = smul.addr %s362, 512
        %s364 = scalar_lea.vmem [#allocation6], %s363
        %p365 = pneg %p89
        %p366 = pneg %p86
        %p367 = pneg %p110
        %p368 = pneg %p107
        %p369 = pneg %p131
        %p370 = pneg %p128
        %p371 = pneg %p152
        %p372 = pneg %p149
        %p373 = pneg %p173
        %p374 = pneg %p170
        %p375 = pneg %p194
        %p376 = pneg %p191
        %p377 = pneg %p220
        %p378 = pneg %p217
        %s379 = sand.u32 %s207, 1
        %s380 = scalar_lea.sflag [#allocation5], %s379
        %s381 = sand.u32 %s207, 1
        %s382 = smul.addr %s381, 128
        %s383 = scalar_lea.vmem [#allocation11], %s382
        %s384 = smul.u32 16, %s32
        %s385 = smul.u32 4, %s33
        %s386 = smul.u32 64, %s33
        %s387 = smul.u32 16, %s32
        %p389 = scmp.eq.s32.totalorder %s33, 0
        // Predicated region
        $region65: #{tpu_custom_call.1} parent=47 // pred_check
          %p390 = pneg %p389
        $region66: #{tpu_custom_call.1} parent=47 // pred_check_branch
          %392 = sbr.rel (%p390) target = $region68
        $region67: #{tpu_custom_call.1} parent=47 // pred_region
          %393 = vst [vmem:[#allocation2] sm:$0xff] 0.0
          %394 = vst [vmem:[#allocation2 + $0x8] sm:$0xff] 0.0
          %395 = vst [vmem:[#allocation2 + $0x10] sm:$0xff] 0.0
          %396 = vst [vmem:[#allocation2 + $0x18] sm:$0xff] 0.0
          %397 = vst [vmem:[#allocation2 + $0x20] sm:$0xff] 0.0
          %398 = vst [vmem:[#allocation2 + $0x28] sm:$0xff] 0.0
          %399 = vst [vmem:[#allocation2 + $0x30] sm:$0xff] 0.0
          %400 = vst [vmem:[#allocation2 + $0x38] sm:$0xff] 0.0
          %401 = vst [vmem:[#allocation2 + $0x40] sm:$0xff] 0.0
          %402 = vst [vmem:[#allocation2 + $0x48] sm:$0xff] 0.0
          %403 = vst [vmem:[#allocation2 + $0x50] sm:$0xff] 0.0
          %404 = vst [vmem:[#allocation2 + $0x58] sm:$0xff] 0.0
          %405 = vst [vmem:[#allocation2 + $0x60] sm:$0xff] 0.0
          %406 = vst [vmem:[#allocation2 + $0x68] sm:$0xff] 0.0
          %407 = vst [vmem:[#allocation2 + $0x70] sm:$0xff] 0.0
          %408 = vst [vmem:[#allocation2 + $0x78] sm:$0xff] 0.0
          %409 = vst [vmem:[#allocation2 + $0x80] sm:$0xff] 0.0
          %410 = vst [vmem:[#allocation2 + $0x88] sm:$0xff] 0.0
          %411 = vst [vmem:[#allocation2 + $0x90] sm:$0xff] 0.0
          %412 = vst [vmem:[#allocation2 + $0x98] sm:$0xff] 0.0
          %413 = vst [vmem:[#allocation2 + $0xa0] sm:$0xff] 0.0
          %414 = vst [vmem:[#allocation2 + $0xa8] sm:$0xff] 0.0
          %415 = vst [vmem:[#allocation2 + $0xb0] sm:$0xff] 0.0
          %416 = vst [vmem:[#allocation2 + $0xb8] sm:$0xff] 0.0
          %417 = vst [vmem:[#allocation2 + $0xc0] sm:$0xff] 0.0
          %418 = vst [vmem:[#allocation2 + $0xc8] sm:$0xff] 0.0
          %419 = vst [vmem:[#allocation2 + $0xd0] sm:$0xff] 0.0
          %420 = vst [vmem:[#allocation2 + $0xd8] sm:$0xff] 0.0
          %421 = vst [vmem:[#allocation2 + $0xe0] sm:$0xff] 0.0
          %422 = vst [vmem:[#allocation2 + $0xe8] sm:$0xff] 0.0
          %423 = vst [vmem:[#allocation2 + $0xf0] sm:$0xff] 0.0
          %424 = vst [vmem:[#allocation2 + $0xf8] sm:$0xff] 0.0
        $region68: #{tpu_custom_call.1} parent=47 // pred_fallthru
          _
        %v425 = vld [vmem:[#allocation2] sm:$0xff]
        %v426 = vld [vmem:[#allocation2 + $0x8] sm:$0xff]
        %v427 = vld [vmem:[#allocation2 + $0x10] sm:$0xff]
        %v428 = vld [vmem:[#allocation2 + $0x18] sm:$0xff]
        %v429 = vld [vmem:[#allocation2 + $0x20] sm:$0xff]
        %v430 = vld [vmem:[#allocation2 + $0x28] sm:$0xff]
        %v431 = vld [vmem:[#allocation2 + $0x30] sm:$0xff]
        %v432 = vld [vmem:[#allocation2 + $0x38] sm:$0xff]
        %v433 = vld [vmem:[#allocation2 + $0x40] sm:$0xff]
        %v434 = vld [vmem:[#allocation2 + $0x48] sm:$0xff]
        %v435 = vld [vmem:[#allocation2 + $0x50] sm:$0xff]
        %v436 = vld [vmem:[#allocation2 + $0x58] sm:$0xff]
        %v437 = vld [vmem:[#allocation2 + $0x60] sm:$0xff]
        %v438 = vld [vmem:[#allocation2 + $0x68] sm:$0xff]
        %v439 = vld [vmem:[#allocation2 + $0x70] sm:$0xff]
        %v440 = vld [vmem:[#allocation2 + $0x78] sm:$0xff]
        %v441 = vld [vmem:[#allocation2 + $0x80] sm:$0xff]
        %v442 = vld [vmem:[#allocation2 + $0x88] sm:$0xff]
        %v443 = vld [vmem:[#allocation2 + $0x90] sm:$0xff]
        %v444 = vld [vmem:[#allocation2 + $0x98] sm:$0xff]
        %v445 = vld [vmem:[#allocation2 + $0xa0] sm:$0xff]
        %v446 = vld [vmem:[#allocation2 + $0xa8] sm:$0xff]
        %v447 = vld [vmem:[#allocation2 + $0xb0] sm:$0xff]
        %v448 = vld [vmem:[#allocation2 + $0xb8] sm:$0xff]
        %v449 = vld [vmem:[#allocation2 + $0xc0] sm:$0xff]
        %v450 = vld [vmem:[#allocation2 + $0xc8] sm:$0xff]
        %v451 = vld [vmem:[#allocation2 + $0xd0] sm:$0xff]
        %v452 = vld [vmem:[#allocation2 + $0xd8] sm:$0xff]
        %v453 = vld [vmem:[#allocation2 + $0xe0] sm:$0xff]
        %v454 = vld [vmem:[#allocation2 + $0xe8] sm:$0xff]
        %v455 = vld [vmem:[#allocation2 + $0xf0] sm:$0xff]
        %v456 = vld [vmem:[#allocation2 + $0xf8] sm:$0xff]
        %v457 = vld [vmem:[%s331] sm:$0xff]
        %v458 = vld [vmem:[%s331 + $0x8] sm:$0xff]
        %v459 = vld [vmem:[%s331 + $0x10] sm:$0xff]
        %v460 = vld [vmem:[%s331 + $0x18] sm:$0xff]
        %v461 = vld [vmem:[%s331 + $0x20] sm:$0xff]
        %v462 = vld [vmem:[%s331 + $0x28] sm:$0xff]
        %v463 = vld [vmem:[%s331 + $0x30] sm:$0xff]
        %v464 = vld [vmem:[%s331 + $0x38] sm:$0xff]
        %v465 = vld [vmem:[%s331 + $0x40] sm:$0xff]
        %v466 = vld [vmem:[%s331 + $0x48] sm:$0xff]
        %v467 = vld [vmem:[%s331 + $0x50] sm:$0xff]
        %v468 = vld [vmem:[%s331 + $0x58] sm:$0xff]
        %v469 = vld [vmem:[%s331 + $0x60] sm:$0xff]
        %v470 = vld [vmem:[%s331 + $0x68] sm:$0xff]
        %v471 = vld [vmem:[%s331 + $0x70] sm:$0xff]
        %v472 = vld [vmem:[%s331 + $0x78] sm:$0xff]
        %v473 = vld [vmem:[%s331 + $0x80] sm:$0xff]
        %v474 = vld [vmem:[%s331 + $0x88] sm:$0xff]
        %v475 = vld [vmem:[%s331 + $0x90] sm:$0xff]
        %v476 = vld [vmem:[%s331 + $0x98] sm:$0xff]
        %v477 = vld [vmem:[%s331 + $0xa0] sm:$0xff]
        %v478 = vld [vmem:[%s331 + $0xa8] sm:$0xff]
        %v479 = vld [vmem:[%s331 + $0xb0] sm:$0xff]
        %v480 = vld [vmem:[%s331 + $0xb8] sm:$0xff]
        %v481 = vld [vmem:[%s331 + $0xc0] sm:$0xff]
        %v482 = vld [vmem:[%s331 + $0xc8] sm:$0xff]
        %v483 = vld [vmem:[%s331 + $0xd0] sm:$0xff]
        %v484 = vld [vmem:[%s331 + $0xd8] sm:$0xff]
        %v485 = vld [vmem:[%s331 + $0xe0] sm:$0xff]
        %v486 = vld [vmem:[%s331 + $0xe8] sm:$0xff]
        %v487 = vld [vmem:[%s331 + $0xf0] sm:$0xff]
        %v488 = vld [vmem:[%s331 + $0xf8] sm:$0xff]
        %v489 = vld [vmem:[%s331 + $0x100] sm:$0xff]
        %v490 = vld [vmem:[%s331 + $0x108] sm:$0xff]
        %v491 = vld [vmem:[%s331 + $0x110] sm:$0xff]
        %v492 = vld [vmem:[%s331 + $0x118] sm:$0xff]
        %v493 = vld [vmem:[%s331 + $0x120] sm:$0xff]
        %v494 = vld [vmem:[%s331 + $0x128] sm:$0xff]
        %v495 = vld [vmem:[%s331 + $0x130] sm:$0xff]
        %v496 = vld [vmem:[%s331 + $0x138] sm:$0xff]
        %v497 = vld [vmem:[%s331 + $0x140] sm:$0xff]
        %v498 = vld [vmem:[%s331 + $0x148] sm:$0xff]
        %v499 = vld [vmem:[%s331 + $0x150] sm:$0xff]
        %v500 = vld [vmem:[%s331 + $0x158] sm:$0xff]
        %v501 = vld [vmem:[%s331 + $0x160] sm:$0xff]
        %v502 = vld [vmem:[%s331 + $0x168] sm:$0xff]
        %v503 = vld [vmem:[%s331 + $0x170] sm:$0xff]
        %v504 = vld [vmem:[%s331 + $0x178] sm:$0xff]
        %v505 = vld [vmem:[%s331 + $0x180] sm:$0xff]
        %v506 = vld [vmem:[%s331 + $0x188] sm:$0xff]
        %v507 = vld [vmem:[%s331 + $0x190] sm:$0xff]
        %v508 = vld [vmem:[%s331 + $0x198] sm:$0xff]
        %v509 = vld [vmem:[%s331 + $0x1a0] sm:$0xff]
        %v510 = vld [vmem:[%s331 + $0x1a8] sm:$0xff]
        %v511 = vld [vmem:[%s331 + $0x1b0] sm:$0xff]
        %v512 = vld [vmem:[%s331 + $0x1b8] sm:$0xff]
        %v513 = vld [vmem:[%s331 + $0x1c0] sm:$0xff]
        %v514 = vld [vmem:[%s331 + $0x1c8] sm:$0xff]
        %v515 = vld [vmem:[%s331 + $0x1d0] sm:$0xff]
        %v516 = vld [vmem:[%s331 + $0x1d8] sm:$0xff]
        %v517 = vld [vmem:[%s331 + $0x1e0] sm:$0xff]
        %v518 = vld [vmem:[%s331 + $0x1e8] sm:$0xff]
        %v519 = vld [vmem:[%s331 + $0x1f0] sm:$0xff]
        %v520 = vld [vmem:[%s331 + $0x1f8] sm:$0xff]
        %v521 = vpack.c.bf16 %v461, %v457
        %v522 = vpack.c.bf16 %v462, %v458
        %v523 = vpack.c.bf16 %v463, %v459
        %v524 = vpack.c.bf16 %v464, %v460
        %v525 = vpack.c.bf16 %v469, %v465
        %v526 = vpack.c.bf16 %v470, %v466
        %v527 = vpack.c.bf16 %v471, %v467
        %v528 = vpack.c.bf16 %v472, %v468
        %v529 = vpack.c.bf16 %v477, %v473
        %v530 = vpack.c.bf16 %v478, %v474
        %v531 = vpack.c.bf16 %v479, %v475
        %v532 = vpack.c.bf16 %v480, %v476
        %v533 = vpack.c.bf16 %v485, %v481
        %v534 = vpack.c.bf16 %v486, %v482
        %v535 = vpack.c.bf16 %v487, %v483
        %v536 = vpack.c.bf16 %v488, %v484
        %v537 = vpack.c.bf16 %v493, %v489
        %v538 = vpack.c.bf16 %v494, %v490
        %v539 = vpack.c.bf16 %v495, %v491
        %v540 = vpack.c.bf16 %v496, %v492
        %v541 = vpack.c.bf16 %v501, %v497
        %v542 = vpack.c.bf16 %v502, %v498
        %v543 = vpack.c.bf16 %v503, %v499
        %v544 = vpack.c.bf16 %v504, %v500
        %v545 = vpack.c.bf16 %v509, %v505
        %v546 = vpack.c.bf16 %v510, %v506
        %v547 = vpack.c.bf16 %v511, %v507
        %v548 = vpack.c.bf16 %v512, %v508
        %v549 = vpack.c.bf16 %v517, %v513
        %v550 = vpack.c.bf16 %v518, %v514
        %v551 = vpack.c.bf16 %v519, %v515
        %v552 = vpack.c.bf16 %v520, %v516
        %v553 = vld [vmem:[%s340] sm:$0xff]
        %v554 = vld [vmem:[%s340 + $0x8] sm:$0xff]
        %v555 = vld [vmem:[%s340 + $0x10] sm:$0xff]
        %v556 = vld [vmem:[%s340 + $0x18] sm:$0xff]
        %v557 = vld [vmem:[%s340 + $0x20] sm:$0xff]
        %v558 = vld [vmem:[%s340 + $0x28] sm:$0xff]
        %v559 = vld [vmem:[%s340 + $0x30] sm:$0xff]
        %v560 = vld [vmem:[%s340 + $0x38] sm:$0xff]
        %v561 = vld [vmem:[%s340 + $0x40] sm:$0xff]
        %v562 = vld [vmem:[%s340 + $0x48] sm:$0xff]
        %v563 = vld [vmem:[%s340 + $0x50] sm:$0xff]
        %v564 = vld [vmem:[%s340 + $0x58] sm:$0xff]
        %v565 = vld [vmem:[%s340 + $0x60] sm:$0xff]
        %v566 = vld [vmem:[%s340 + $0x68] sm:$0xff]
        %v567 = vld [vmem:[%s340 + $0x70] sm:$0xff]
        %v568 = vld [vmem:[%s340 + $0x78] sm:$0xff]
        %v569 = vld [vmem:[%s340 + $0x80] sm:$0xff]
        %v570 = vld [vmem:[%s340 + $0x88] sm:$0xff]
        %v571 = vld [vmem:[%s340 + $0x90] sm:$0xff]
        %v572 = vld [vmem:[%s340 + $0x98] sm:$0xff]
        %v573 = vld [vmem:[%s340 + $0xa0] sm:$0xff]
        %v574 = vld [vmem:[%s340 + $0xa8] sm:$0xff]
        %v575 = vld [vmem:[%s340 + $0xb0] sm:$0xff]
        %v576 = vld [vmem:[%s340 + $0xb8] sm:$0xff]
        %v577 = vld [vmem:[%s340 + $0xc0] sm:$0xff]
        %v578 = vld [vmem:[%s340 + $0xc8] sm:$0xff]
        %v579 = vld [vmem:[%s340 + $0xd0] sm:$0xff]
        %v580 = vld [vmem:[%s340 + $0xd8] sm:$0xff]
        %v581 = vld [vmem:[%s340 + $0xe0] sm:$0xff]
        %v582 = vld [vmem:[%s340 + $0xe8] sm:$0xff]
        %v583 = vld [vmem:[%s340 + $0xf0] sm:$0xff]
        %v584 = vld [vmem:[%s340 + $0xf8] sm:$0xff]
        %v585 = vld [vmem:[%s340 + $0x100] sm:$0xff]
        %v586 = vld [vmem:[%s340 + $0x108] sm:$0xff]
        %v587 = vld [vmem:[%s340 + $0x110] sm:$0xff]
        %v588 = vld [vmem:[%s340 + $0x118] sm:$0xff]
        %v589 = vld [vmem:[%s340 + $0x120] sm:$0xff]
        %v590 = vld [vmem:[%s340 + $0x128] sm:$0xff]
        %v591 = vld [vmem:[%s340 + $0x130] sm:$0xff]
        %v592 = vld [vmem:[%s340 + $0x138] sm:$0xff]
        %v593 = vld [vmem:[%s340 + $0x140] sm:$0xff]
        %v594 = vld [vmem:[%s340 + $0x148] sm:$0xff]
        %v595 = vld [vmem:[%s340 + $0x150] sm:$0xff]
        %v596 = vld [vmem:[%s340 + $0x158] sm:$0xff]
        %v597 = vld [vmem:[%s340 + $0x160] sm:$0xff]
        %v598 = vld [vmem:[%s340 + $0x168] sm:$0xff]
        %v599 = vld [vmem:[%s340 + $0x170] sm:$0xff]
        %v600 = vld [vmem:[%s340 + $0x178] sm:$0xff]
        %v601 = vld [vmem:[%s340 + $0x180] sm:$0xff]
        %v602 = vld [vmem:[%s340 + $0x188] sm:$0xff]
        %v603 = vld [vmem:[%s340 + $0x190] sm:$0xff]
        %v604 = vld [vmem:[%s340 + $0x198] sm:$0xff]
        %v605 = vld [vmem:[%s340 + $0x1a0] sm:$0xff]
        %v606 = vld [vmem:[%s340 + $0x1a8] sm:$0xff]
        %v607 = vld [vmem:[%s340 + $0x1b0] sm:$0xff]
        %v608 = vld [vmem:[%s340 + $0x1b8] sm:$0xff]
        %v609 = vld [vmem:[%s340 + $0x1c0] sm:$0xff]
        %v610 = vld [vmem:[%s340 + $0x1c8] sm:$0xff]
        %v611 = vld [vmem:[%s340 + $0x1d0] sm:$0xff]
        %v612 = vld [vmem:[%s340 + $0x1d8] sm:$0xff]
        %v613 = vld [vmem:[%s340 + $0x1e0] sm:$0xff]
        %v614 = vld [vmem:[%s340 + $0x1e8] sm:$0xff]
        %v615 = vld [vmem:[%s340 + $0x1f0] sm:$0xff]
        %v616 = vld [vmem:[%s340 + $0x1f8] sm:$0xff]
        %v681 = vunpack.c.l.b16 %v553
        %v682 = vunpack.c.h.b16 %v553
        %v683 = vunpack.c.l.b16 %v554
        %v684 = vunpack.c.h.b16 %v554
        %v685 = vunpack.c.l.b16 %v555
        %v686 = vunpack.c.h.b16 %v555
        %v687 = vunpack.c.l.b16 %v556
        %v688 = vunpack.c.h.b16 %v556
        %v689 = vunpack.c.l.b16 %v557
        %v690 = vunpack.c.h.b16 %v557
        %v691 = vunpack.c.l.b16 %v558
        %v692 = vunpack.c.h.b16 %v558
        %v693 = vunpack.c.l.b16 %v559
        %v694 = vunpack.c.h.b16 %v559
        %v695 = vunpack.c.l.b16 %v560
        %v696 = vunpack.c.h.b16 %v560
        %v697 = vunpack.c.l.b16 %v561
        %v698 = vunpack.c.h.b16 %v561
        %v699 = vunpack.c.l.b16 %v562
        %v700 = vunpack.c.h.b16 %v562
        %v701 = vunpack.c.l.b16 %v563
        %v702 = vunpack.c.h.b16 %v563
        %v703 = vunpack.c.l.b16 %v564
        %v704 = vunpack.c.h.b16 %v564
        %v705 = vunpack.c.l.b16 %v565
        %v706 = vunpack.c.h.b16 %v565
        %v707 = vunpack.c.l.b16 %v566
        %v708 = vunpack.c.h.b16 %v566
        %v709 = vunpack.c.l.b16 %v567
        %v710 = vunpack.c.h.b16 %v567
        %v711 = vunpack.c.l.b16 %v568
        %v712 = vunpack.c.h.b16 %v568
        %v713 = vunpack.c.l.b16 %v569
        %v714 = vunpack.c.h.b16 %v569
        %v715 = vunpack.c.l.b16 %v570
        %v716 = vunpack.c.h.b16 %v570
        %v717 = vunpack.c.l.b16 %v571
        %v718 = vunpack.c.h.b16 %v571
        %v719 = vunpack.c.l.b16 %v572
        %v720 = vunpack.c.h.b16 %v572
        %v721 = vunpack.c.l.b16 %v573
        %v722 = vunpack.c.h.b16 %v573
        %v723 = vunpack.c.l.b16 %v574
        %v724 = vunpack.c.h.b16 %v574
        %v725 = vunpack.c.l.b16 %v575
        %v726 = vunpack.c.h.b16 %v575
        %v727 = vunpack.c.l.b16 %v576
        %v728 = vunpack.c.h.b16 %v576
        %v729 = vunpack.c.l.b16 %v577
        %v730 = vunpack.c.h.b16 %v577
        %v731 = vunpack.c.l.b16 %v578
        %v732 = vunpack.c.h.b16 %v578
        %v733 = vunpack.c.l.b16 %v579
        %v734 = vunpack.c.h.b16 %v579
        %v735 = vunpack.c.l.b16 %v580
        %v736 = vunpack.c.h.b16 %v580
        %v737 = vunpack.c.l.b16 %v581
        %v738 = vunpack.c.h.b16 %v581
        %v739 = vunpack.c.l.b16 %v582
        %v740 = vunpack.c.h.b16 %v582
        %v741 = vunpack.c.l.b16 %v583
        %v742 = vunpack.c.h.b16 %v583
        %v743 = vunpack.c.l.b16 %v584
        %v744 = vunpack.c.h.b16 %v584
        %v745 = vunpack.c.l.b16 %v585
        %v746 = vunpack.c.h.b16 %v585
        %v747 = vunpack.c.l.b16 %v586
        %v748 = vunpack.c.h.b16 %v586
        %v749 = vunpack.c.l.b16 %v587
        %v750 = vunpack.c.h.b16 %v587
        %v751 = vunpack.c.l.b16 %v588
        %v752 = vunpack.c.h.b16 %v588
        %v753 = vunpack.c.l.b16 %v589
        %v754 = vunpack.c.h.b16 %v589
        %v755 = vunpack.c.l.b16 %v590
        %v756 = vunpack.c.h.b16 %v590
        %v757 = vunpack.c.l.b16 %v591
        %v758 = vunpack.c.h.b16 %v591
        %v759 = vunpack.c.l.b16 %v592
        %v760 = vunpack.c.h.b16 %v592
        %v761 = vunpack.c.l.b16 %v593
        %v762 = vunpack.c.h.b16 %v593
        %v763 = vunpack.c.l.b16 %v594
        %v764 = vunpack.c.h.b16 %v594
        %v765 = vunpack.c.l.b16 %v595
        %v766 = vunpack.c.h.b16 %v595
        %v767 = vunpack.c.l.b16 %v596
        %v768 = vunpack.c.h.b16 %v596
        %v769 = vunpack.c.l.b16 %v597
        %v770 = vunpack.c.h.b16 %v597
        %v771 = vunpack.c.l.b16 %v598
        %v772 = vunpack.c.h.b16 %v598
        %v773 = vunpack.c.l.b16 %v599
        %v774 = vunpack.c.h.b16 %v599
        %v775 = vunpack.c.l.b16 %v600
        %v776 = vunpack.c.h.b16 %v600
        %v777 = vunpack.c.l.b16 %v601
        %v778 = vunpack.c.h.b16 %v601
        %v779 = vunpack.c.l.b16 %v602
        %v780 = vunpack.c.h.b16 %v602
        %v781 = vunpack.c.l.b16 %v603
        %v782 = vunpack.c.h.b16 %v603
        %v783 = vunpack.c.l.b16 %v604
        %v784 = vunpack.c.h.b16 %v604
        %v785 = vunpack.c.l.b16 %v605
        %v786 = vunpack.c.h.b16 %v605
        %v787 = vunpack.c.l.b16 %v606
        %v788 = vunpack.c.h.b16 %v606
        %v789 = vunpack.c.l.b16 %v607
        %v790 = vunpack.c.h.b16 %v607
        %v791 = vunpack.c.l.b16 %v608
        %v792 = vunpack.c.h.b16 %v608
        %v793 = vunpack.c.l.b16 %v609
        %v794 = vunpack.c.h.b16 %v609
        %v795 = vunpack.c.l.b16 %v610
        %v796 = vunpack.c.h.b16 %v610
        %v797 = vunpack.c.l.b16 %v611
        %v798 = vunpack.c.h.b16 %v611
        %v799 = vunpack.c.l.b16 %v612
        %v800 = vunpack.c.h.b16 %v612
        %v801 = vunpack.c.l.b16 %v613
        %v802 = vunpack.c.h.b16 %v613
        %v803 = vunpack.c.l.b16 %v614
        %v804 = vunpack.c.h.b16 %v614
        %v805 = vunpack.c.l.b16 %v615
        %v806 = vunpack.c.h.b16 %v615
        %v807 = vunpack.c.l.b16 %v616
        %v808 = vunpack.c.h.b16 %v616
        %v809 = vpack.c.b16 %v683, %v681
        %v810 = vpack.c.b16 %v684, %v682
        %v811 = vpack.c.b16 %v687, %v685
        %v812 = vpack.c.b16 %v688, %v686
        %v813 = vpack.c.b16 %v691, %v689
        %v814 = vpack.c.b16 %v692, %v690
        %v815 = vpack.c.b16 %v695, %v693
        %v816 = vpack.c.b16 %v696, %v694
        %v817 = vpack.c.b16 %v699, %v697
        %v818 = vpack.c.b16 %v700, %v698
        %v819 = vpack.c.b16 %v703, %v701
        %v820 = vpack.c.b16 %v704, %v702
        %v821 = vpack.c.b16 %v707, %v705
        %v822 = vpack.c.b16 %v708, %v706
        %v823 = vpack.c.b16 %v711, %v709
        %v824 = vpack.c.b16 %v712, %v710
        %v825 = vpack.c.b16 %v715, %v713
        %v826 = vpack.c.b16 %v716, %v714
        %v827 = vpack.c.b16 %v719, %v717
        %v828 = vpack.c.b16 %v720, %v718
        %v829 = vpack.c.b16 %v723, %v721
        %v830 = vpack.c.b16 %v724, %v722
        %v831 = vpack.c.b16 %v727, %v725
        %v832 = vpack.c.b16 %v728, %v726
        %v833 = vpack.c.b16 %v731, %v729
        %v834 = vpack.c.b16 %v732, %v730
        %v835 = vpack.c.b16 %v735, %v733
        %v836 = vpack.c.b16 %v736, %v734
        %v837 = vpack.c.b16 %v739, %v737
        %v838 = vpack.c.b16 %v740, %v738
        %v839 = vpack.c.b16 %v743, %v741
        %v840 = vpack.c.b16 %v744, %v742
        %v841 = vpack.c.b16 %v747, %v745
        %v842 = vpack.c.b16 %v748, %v746
        %v843 = vpack.c.b16 %v751, %v749
        %v844 = vpack.c.b16 %v752, %v750
        %v845 = vpack.c.b16 %v755, %v753
        %v846 = vpack.c.b16 %v756, %v754
        %v847 = vpack.c.b16 %v759, %v757
        %v848 = vpack.c.b16 %v760, %v758
        %v849 = vpack.c.b16 %v763, %v761
        %v850 = vpack.c.b16 %v764, %v762
        %v851 = vpack.c.b16 %v767, %v765
        %v852 = vpack.c.b16 %v768, %v766
        %v853 = vpack.c.b16 %v771, %v769
        %v854 = vpack.c.b16 %v772, %v770
        %v855 = vpack.c.b16 %v775, %v773
        %v856 = vpack.c.b16 %v776, %v774
        %v857 = vpack.c.b16 %v779, %v777
        %v858 = vpack.c.b16 %v780, %v778
        %v859 = vpack.c.b16 %v783, %v781
        %v860 = vpack.c.b16 %v784, %v782
        %v861 = vpack.c.b16 %v787, %v785
        %v862 = vpack.c.b16 %v788, %v786
        %v863 = vpack.c.b16 %v791, %v789
        %v864 = vpack.c.b16 %v792, %v790
        %v865 = vpack.c.b16 %v795, %v793
        %v866 = vpack.c.b16 %v796, %v794
        %v867 = vpack.c.b16 %v799, %v797
        %v868 = vpack.c.b16 %v800, %v798
        %v869 = vpack.c.b16 %v803, %v801
        %v870 = vpack.c.b16 %v804, %v802
        %v871 = vpack.c.b16 %v807, %v805
        %v872 = vpack.c.b16 %v808, %v806
        %937 = vmatprep.subr.bf16.mxu0 %v810
        %938 = vmatpush1.bf16.msra.mxu0 %v809
        %939 = vmatprep.subr.bf16.mxu0 %v812
        %940 = vmatpush1.bf16.msra.mxu0 %v811
        %941 = vmatprep.subr.bf16.mxu0 %v814
        %942 = vmatpush1.bf16.msra.mxu0 %v813
        %943 = vmatprep.subr.bf16.mxu0 %v816
        %944 = vmatpush1.bf16.msra.mxu0 %v815
        %945 = vmatprep.subr.bf16.mxu0 %v818
        %946 = vmatpush1.bf16.msra.mxu0 %v817
        %947 = vmatprep.subr.bf16.mxu0 %v820
        %948 = vmatpush1.bf16.msra.mxu0 %v819
        %949 = vmatprep.subr.bf16.mxu0 %v822
        %950 = vmatpush1.bf16.msra.mxu0 %v821
        %951 = vmatprep.subr.bf16.mxu0 %v824
        %952 = vmatpush1.bf16.msra.mxu0 %v823
        %953 = vmatprep.subr.bf16.mxu0 %v826
        %954 = vmatpush1.bf16.msra.mxu0 %v825
        %955 = vmatprep.subr.bf16.mxu0 %v828
        %956 = vmatpush1.bf16.msra.mxu0 %v827
        %957 = vmatprep.subr.bf16.mxu0 %v830
        %958 = vmatpush1.bf16.msra.mxu0 %v829
        %959 = vmatprep.subr.bf16.mxu0 %v832
        %960 = vmatpush1.bf16.msra.mxu0 %v831
        %961 = vmatprep.subr.bf16.mxu0 %v834
        %962 = vmatpush1.bf16.msra.mxu0 %v833
        %963 = vmatprep.subr.bf16.mxu0 %v836
        %964 = vmatpush1.bf16.msra.mxu0 %v835
        %965 = vmatprep.subr.bf16.mxu0 %v838
        %966 = vmatpush1.bf16.msra.mxu0 %v837
        %967 = vmatprep.subr.bf16.mxu0 %v840
        %968 = vmatpush1.bf16.msra.mxu0 %v839
        %969 = vmatprep.mubr.bf16.mxu0 %v522
        %970 = vmatmul.mubr.bf16.gmra.mrb[0].mxu0 %v521
        %v971 = vpop.f32.mrb[0].mxu0
        %v972 = vadd.f32 0.0, %v971
        %v973 = vpop.f32.mrb[0].mxu0
        %v974 = vadd.f32 0.0, %v973
        %v975 = vpop.f32.mrb[0].mxu0
        %v976 = vadd.f32 0.0, %v975
        %v977 = vpop.f32.mrb[0].mxu0
        %v978 = vadd.f32 0.0, %v977
        %979 = vmatprep.mubr.bf16.mxu0 %v526
        %980 = vmatmul.mubr.bf16.gmra.mrb[0].mxu0 %v525
        %v981 = vpop.f32.mrb[0].mxu0
        %v982 = vadd.f32 0.0, %v981
        %v983 = vpop.f32.mrb[0].mxu0
        %v984 = vadd.f32 0.0, %v983
        %v985 = vpop.f32.mrb[0].mxu0
        %v986 = vadd.f32 0.0, %v985
        %v987 = vpop.f32.mrb[0].mxu0
        %v988 = vadd.f32 0.0, %v987
        %989 = vmatprep.mubr.bf16.mxu0 %v530
        %990 = vmatmul.mubr.bf16.gmra.mrb[0].mxu0 %v529
        %v991 = vpop.f32.mrb[0].mxu0
        %v992 = vadd.f32 0.0, %v991
        %v993 = vpop.f32.mrb[0].mxu0
        %v994 = vadd.f32 0.0, %v993
        %v995 = vpop.f32.mrb[0].mxu0
        %v996 = vadd.f32 0.0, %v995
        %v997 = vpop.f32.mrb[0].mxu0
        %v998 = vadd.f32 0.0, %v997
        %999 = vmatprep.mubr.bf16.mxu0 %v534
        %1000 = vmatmul.mubr.bf16.gmra.mrb[0].mxu0 %v533
        %v1001 = vpop.f32.mrb[0].mxu0
        %v1002 = vadd.f32 0.0, %v1001
        %v1003 = vpop.f32.mrb[0].mxu0
        %v1004 = vadd.f32 0.0, %v1003
        %v1005 = vpop.f32.mrb[0].mxu0
        %v1006 = vadd.f32 0.0, %v1005
        %v1007 = vpop.f32.mrb[0].mxu0
        %v1008 = vadd.f32 0.0, %v1007
        %1009 = vmatprep.mubr.bf16.mxu0 %v538
        %1010 = vmatmul.mubr.bf16.gmra.mrb[0].mxu0 %v537
        %v1011 = vpop.f32.mrb[0].mxu0
        %v1012 = vadd.f32 0.0, %v1011
        %v1013 = vpop.f32.mrb[0].mxu0
        %v1014 = vadd.f32 0.0, %v1013
        %v1015 = vpop.f32.mrb[0].mxu0
        %v1016 = vadd.f32 0.0, %v1015
        %v1017 = vpop.f32.mrb[0].mxu0
        %v1018 = vadd.f32 0.0, %v1017
        %1019 = vmatprep.mubr.bf16.mxu0 %v542
        %1020 = vmatmul.mubr.bf16.gmra.mrb[0].mxu0 %v541
        %v1021 = vpop.f32.mrb[0].mxu0
        %v1022 = vadd.f32 0.0, %v1021
        %v1023 = vpop.f32.mrb[0].mxu0
        %v1024 = vadd.f32 0.0, %v1023
        %v1025 = vpop.f32.mrb[0].mxu0
        %v1026 = vadd.f32 0.0, %v1025
        %v1027 = vpop.f32.mrb[0].mxu0
        %v1028 = vadd.f32 0.0, %v1027
        %1029 = vmatprep.mubr.bf16.mxu0 %v546
        %1030 = vmatmul.mubr.bf16.gmra.mrb[0].mxu0 %v545
        %v1031 = vpop.f32.mrb[0].mxu0
        %v1032 = vadd.f32 0.0, %v1031
        %v1033 = vpop.f32.mrb[0].mxu0
        %v1034 = vadd.f32 0.0, %v1033
        %v1035 = vpop.f32.mrb[0].mxu0
        %v1036 = vadd.f32 0.0, %v1035
        %v1037 = vpop.f32.mrb[0].mxu0
        %v1038 = vadd.f32 0.0, %v1037
        %1039 = vmatprep.mubr.bf16.mxu0 %v550
        %1040 = vmatmul.mubr.bf16.gmra.mrb[0].mxu0 %v549
        %v1041 = vpop.f32.mrb[0].mxu0
        %v1042 = vadd.f32 0.0, %v1041
        %v1043 = vpop.f32.mrb[0].mxu0
        %v1044 = vadd.f32 0.0, %v1043
        %v1045 = vpop.f32.mrb[0].mxu0
        %v1046 = vadd.f32 0.0, %v1045
        %v1047 = vpop.f32.mrb[0].mxu0
        %v1048 = vadd.f32 0.0, %v1047
        %1049 = vdwg.mxu0
        %1050 = vmatprep.subr.bf16.mxu0 %v842
        %1051 = vmatpush1.bf16.msra.mxu0 %v841
        %1052 = vmatprep.subr.bf16.mxu0 %v844
        %1053 = vmatpush1.bf16.msra.mxu0 %v843
        %1054 = vmatprep.subr.bf16.mxu0 %v846
        %1055 = vmatpush1.bf16.msra.mxu0 %v845
        %1056 = vmatprep.subr.bf16.mxu0 %v848
        %1057 = vmatpush1.bf16.msra.mxu0 %v847
        %1058 = vmatprep.subr.bf16.mxu0 %v850
        %1059 = vmatpush1.bf16.msra.mxu0 %v849
        %1060 = vmatprep.subr.bf16.mxu0 %v852
        %1061 = vmatpush1.bf16.msra.mxu0 %v851
        %1062 = vmatprep.subr.bf16.mxu0 %v854
        %1063 = vmatpush1.bf16.msra.mxu0 %v853
        %1064 = vmatprep.subr.bf16.mxu0 %v856
        %1065 = vmatpush1.bf16.msra.mxu0 %v855
        %1066 = vmatprep.subr.bf16.mxu0 %v858
        %1067 = vmatpush1.bf16.msra.mxu0 %v857
        %1068 = vmatprep.subr.bf16.mxu0 %v860
        %1069 = vmatpush1.bf16.msra.mxu0 %v859
        %1070 = vmatprep.subr.bf16.mxu0 %v862
        %1071 = vmatpush1.bf16.msra.mxu0 %v861
        %1072 = vmatprep.subr.bf16.mxu0 %v864
        %1073 = vmatpush1.bf16.msra.mxu0 %v863
        %1074 = vmatprep.subr.bf16.mxu0 %v866
        %1075 = vmatpush1.bf16.msra.mxu0 %v865
        %1076 = vmatprep.subr.bf16.mxu0 %v868
        %1077 = vmatpush1.bf16.msra.mxu0 %v867
        %1078 = vmatprep.subr.bf16.mxu0 %v870
        %1079 = vmatpush1.bf16.msra.mxu0 %v869
        %1080 = vmatprep.subr.bf16.mxu0 %v872
        %1081 = vmatpush1.bf16.msra.mxu0 %v871
        %1082 = vmatprep.mubr.bf16.mxu0 %v524
        %1083 = vmatmul.mubr.bf16.gmra.mrb[0].mxu0 %v523
        %v1084 = vpop.f32.mrb[0].mxu0
        %v1085 = vadd.f32 %v972, %v1084
        %v1086 = vpop.f32.mrb[0].mxu0
        %v1087 = vadd.f32 %v974, %v1086
        %v1088 = vpop.f32.mrb[0].mxu0
        %v1089 = vadd.f32 %v976, %v1088
        %v1090 = vpop.f32.mrb[0].mxu0
        %v1091 = vadd.f32 %v978, %v1090
        %1092 = vmatprep.mubr.bf16.mxu0 %v528
        %1093 = vmatmul.mubr.bf16.gmra.mrb[0].mxu0 %v527
        %v1094 = vpop.f32.mrb[0].mxu0
        %v1095 = vadd.f32 %v982, %v1094
        %v1096 = vpop.f32.mrb[0].mxu0
        %v1097 = vadd.f32 %v984, %v1096
        %v1098 = vpop.f32.mrb[0].mxu0
        %v1099 = vadd.f32 %v986, %v1098
        %v1100 = vpop.f32.mrb[0].mxu0
        %v1101 = vadd.f32 %v988, %v1100
        %1102 = vmatprep.mubr.bf16.mxu0 %v532
        %1103 = vmatmul.mubr.bf16.gmra.mrb[0].mxu0 %v531
        %v1104 = vpop.f32.mrb[0].mxu0
        %v1105 = vadd.f32 %v992, %v1104
        %v1106 = vpop.f32.mrb[0].mxu0
        %v1107 = vadd.f32 %v994, %v1106
        %v1108 = vpop.f32.mrb[0].mxu0
        %v1109 = vadd.f32 %v996, %v1108
        %v1110 = vpop.f32.mrb[0].mxu0
        %v1111 = vadd.f32 %v998, %v1110
        %1112 = vmatprep.mubr.bf16.mxu0 %v536
        %1113 = vmatmul.mubr.bf16.gmra.mrb[0].mxu0 %v535
        %v1114 = vpop.f32.mrb[0].mxu0
        %v1115 = vadd.f32 %v1002, %v1114
        %v1116 = vpop.f32.mrb[0].mxu0
        %v1117 = vadd.f32 %v1004, %v1116
        %v1118 = vpop.f32.mrb[0].mxu0
        %v1119 = vadd.f32 %v1006, %v1118
        %v1120 = vpop.f32.mrb[0].mxu0
        %v1121 = vadd.f32 %v1008, %v1120
        %1122 = vmatprep.mubr.bf16.mxu0 %v540
        %1123 = vmatmul.mubr.bf16.gmra.mrb[0].mxu0 %v539
        %v1124 = vpop.f32.mrb[0].mxu0
        %v1125 = vadd.f32 %v1012, %v1124
        %v1126 = vpop.f32.mrb[0].mxu0
        %v1127 = vadd.f32 %v1014, %v1126
        %v1128 = vpop.f32.mrb[0].mxu0
        %v1129 = vadd.f32 %v1016, %v1128
        %v1130 = vpop.f32.mrb[0].mxu0
        %v1131 = vadd.f32 %v1018, %v1130
        %1132 = vmatprep.mubr.bf16.mxu0 %v544
        %1133 = vmatmul.mubr.bf16.gmra.mrb[0].mxu0 %v543
        %v1134 = vpop.f32.mrb[0].mxu0
        %v1135 = vadd.f32 %v1022, %v1134
        %v1136 = vpop.f32.mrb[0].mxu0
        %v1137 = vadd.f32 %v1024, %v1136
        %v1138 = vpop.f32.mrb[0].mxu0
        %v1139 = vadd.f32 %v1026, %v1138
        %v1140 = vpop.f32.mrb[0].mxu0
        %v1141 = vadd.f32 %v1028, %v1140
        %1142 = vmatprep.mubr.bf16.mxu0 %v548
        %1143 = vmatmul.mubr.bf16.gmra.mrb[0].mxu0 %v547
        %v1144 = vpop.f32.mrb[0].mxu0
        %v1145 = vadd.f32 %v1032, %v1144
        %v1146 = vpop.f32.mrb[0].mxu0
        %v1147 = vadd.f32 %v1034, %v1146
        %v1148 = vpop.f32.mrb[0].mxu0
        %v1149 = vadd.f32 %v1036, %v1148
        %v1150 = vpop.f32.mrb[0].mxu0
        %v1151 = vadd.f32 %v1038, %v1150
        %1152 = vmatprep.mubr.bf16.mxu0 %v552
        %1153 = vmatmul.mubr.bf16.gmra.mrb[0].mxu0 %v551
        %v1154 = vpop.f32.mrb[0].mxu0
        %v1155 = vadd.f32 %v1042, %v1154
        %v1156 = vpop.f32.mrb[0].mxu0
        %v1157 = vadd.f32 %v1044, %v1156
        %v1158 = vpop.f32.mrb[0].mxu0
        %v1159 = vadd.f32 %v1046, %v1158
        %v1160 = vpop.f32.mrb[0].mxu0
        %v1161 = vadd.f32 %v1048, %v1160
        %1162 = vdwg.mxu0
        %v1163 = vadd.f32 %v425, %v1085
        %v1164 = vadd.f32 %v426, %v1087
        %v1165 = vadd.f32 %v427, %v1089
        %v1166 = vadd.f32 %v428, %v1091
        %v1167 = vadd.f32 %v429, %v1095
        %v1168 = vadd.f32 %v430, %v1097
        %v1169 = vadd.f32 %v431, %v1099
        %v1170 = vadd.f32 %v432, %v1101
        %v1171 = vadd.f32 %v433, %v1105
        %v1172 = vadd.f32 %v434, %v1107
        %v1173 = vadd.f32 %v435, %v1109
        %v1174 = vadd.f32 %v436, %v1111
        %v1175 = vadd.f32 %v437, %v1115
        %v1176 = vadd.f32 %v438, %v1117
        %v1177 = vadd.f32 %v439, %v1119
        %v1178 = vadd.f32 %v440, %v1121
        %v1179 = vadd.f32 %v441, %v1125
        %v1180 = vadd.f32 %v442, %v1127
        %v1181 = vadd.f32 %v443, %v1129
        %v1182 = vadd.f32 %v444, %v1131
        %v1183 = vadd.f32 %v445, %v1135
        %v1184 = vadd.f32 %v446, %v1137
        %v1185 = vadd.f32 %v447, %v1139
        %v1186 = vadd.f32 %v448, %v1141
        %v1187 = vadd.f32 %v449, %v1145
        %v1188 = vadd.f32 %v450, %v1147
        %v1189 = vadd.f32 %v451, %v1149
        %v1190 = vadd.f32 %v452, %v1151
        %v1191 = vadd.f32 %v453, %v1155
        %v1192 = vadd.f32 %v454, %v1157
        %v1193 = vadd.f32 %v455, %v1159
        %v1194 = vadd.f32 %v456, %v1161
        %1195 = vst [vmem:[#allocation2] sm:$0xff] %v1163
        %1196 = vst [vmem:[#allocation2 + $0x8] sm:$0xff] %v1164
        %1197 = vst [vmem:[#allocation2 + $0x10] sm:$0xff] %v1165
        %1198 = vst [vmem:[#allocation2 + $0x18] sm:$0xff] %v1166
        %1199 = vst [vmem:[#allocation2 + $0x20] sm:$0xff] %v1167
        %1200 = vst [vmem:[#allocation2 + $0x28] sm:$0xff] %v1168
        %1201 = vst [vmem:[#allocation2 + $0x30] sm:$0xff] %v1169
        %1202 = vst [vmem:[#allocation2 + $0x38] sm:$0xff] %v1170
        %1203 = vst [vmem:[#allocation2 + $0x40] sm:$0xff] %v1171
        %1204 = vst [vmem:[#allocation2 + $0x48] sm:$0xff] %v1172
        %1205 = vst [vmem:[#allocation2 + $0x50] sm:$0xff] %v1173
        %1206 = vst [vmem:[#allocation2 + $0x58] sm:$0xff] %v1174
        %1207 = vst [vmem:[#allocation2 + $0x60] sm:$0xff] %v1175
        %1208 = vst [vmem:[#allocation2 + $0x68] sm:$0xff] %v1176
        %1209 = vst [vmem:[#allocation2 + $0x70] sm:$0xff] %v1177
        %1210 = vst [vmem:[#allocation2 + $0x78] sm:$0xff] %v1178
        %1211 = vst [vmem:[#allocation2 + $0x80] sm:$0xff] %v1179
        %1212 = vst [vmem:[#allocation2 + $0x88] sm:$0xff] %v1180
        %1213 = vst [vmem:[#allocation2 + $0x90] sm:$0xff] %v1181
        %1214 = vst [vmem:[#allocation2 + $0x98] sm:$0xff] %v1182
        %1215 = vst [vmem:[#allocation2 + $0xa0] sm:$0xff] %v1183
        %1216 = vst [vmem:[#allocation2 + $0xa8] sm:$0xff] %v1184
        %1217 = vst [vmem:[#allocation2 + $0xb0] sm:$0xff] %v1185
        %1218 = vst [vmem:[#allocation2 + $0xb8] sm:$0xff] %v1186
        %1219 = vst [vmem:[#allocation2 + $0xc0] sm:$0xff] %v1187
        %1220 = vst [vmem:[#allocation2 + $0xc8] sm:$0xff] %v1188
        %1221 = vst [vmem:[#allocation2 + $0xd0] sm:$0xff] %v1189
        %1222 = vst [vmem:[#allocation2 + $0xd8] sm:$0xff] %v1190
        %1223 = vst [vmem:[#allocation2 + $0xe0] sm:$0xff] %v1191
        %1224 = vst [vmem:[#allocation2 + $0xe8] sm:$0xff] %v1192
        %1225 = vst [vmem:[#allocation2 + $0xf0] sm:$0xff] %v1193
        %1226 = vst [vmem:[#allocation2 + $0xf8] sm:$0xff] %v1194
        %p1227 = scmp.eq.s32.totalorder %s33, 1
        // Predicated region
        $region69: #{tpu_custom_call.1} parent=47 // pred_check
          %p1228 = pneg %p1227
        $region70: #{tpu_custom_call.1} parent=47 // pred_check_branch
          %1230 = sbr.rel (%p1228) target = $region72
        $region71: #{tpu_custom_call.1} parent=47 // pred_region
          %v1231 = vld [vmem:[#allocation2] sm:$0xff]
          %v1232 = vld [vmem:[#allocation2 + $0x8] sm:$0xff]
          %v1233 = vld [vmem:[#allocation2 + $0x10] sm:$0xff]
          %v1234 = vld [vmem:[#allocation2 + $0x18] sm:$0xff]
          %v1235 = vld [vmem:[#allocation2 + $0x20] sm:$0xff]
          %v1236 = vld [vmem:[#allocation2 + $0x28] sm:$0xff]
          %v1237 = vld [vmem:[#allocation2 + $0x30] sm:$0xff]
          %v1238 = vld [vmem:[#allocation2 + $0x38] sm:$0xff]
          %v1239 = vld [vmem:[#allocation2 + $0x40] sm:$0xff]
          %v1240 = vld [vmem:[#allocation2 + $0x48] sm:$0xff]
          %v1241 = vld [vmem:[#allocation2 + $0x50] sm:$0xff]
          %v1242 = vld [vmem:[#allocation2 + $0x58] sm:$0xff]
          %v1243 = vld [vmem:[#allocation2 + $0x60] sm:$0xff]
          %v1244 = vld [vmem:[#allocation2 + $0x68] sm:$0xff]
          %v1245 = vld [vmem:[#allocation2 + $0x70] sm:$0xff]
          %v1246 = vld [vmem:[#allocation2 + $0x78] sm:$0xff]
          %v1247 = vld [vmem:[#allocation2 + $0x80] sm:$0xff]
          %v1248 = vld [vmem:[#allocation2 + $0x88] sm:$0xff]
          %v1249 = vld [vmem:[#allocation2 + $0x90] sm:$0xff]
          %v1250 = vld [vmem:[#allocation2 + $0x98] sm:$0xff]
          %v1251 = vld [vmem:[#allocation2 + $0xa0] sm:$0xff]
          %v1252 = vld [vmem:[#allocation2 + $0xa8] sm:$0xff]
          %v1253 = vld [vmem:[#allocation2 + $0xb0] sm:$0xff]
          %v1254 = vld [vmem:[#allocation2 + $0xb8] sm:$0xff]
          %v1255 = vld [vmem:[#allocation2 + $0xc0] sm:$0xff]
          %v1256 = vld [vmem:[#allocation2 + $0xc8] sm:$0xff]
          %v1257 = vld [vmem:[#allocation2 + $0xd0] sm:$0xff]
          %v1258 = vld [vmem:[#allocation2 + $0xd8] sm:$0xff]
          %v1259 = vld [vmem:[#allocation2 + $0xe0] sm:$0xff]
          %v1260 = vld [vmem:[#allocation2 + $0xe8] sm:$0xff]
          %v1261 = vld [vmem:[#allocation2 + $0xf0] sm:$0xff]
          %v1262 = vld [vmem:[#allocation2 + $0xf8] sm:$0xff]
          %v1263 = vld [vmem:[%s2] sm:$0x3]
          %v1265 = vlaneseq
          %v1266 = vshrl.u32 %v1265, 7
          %v1267 = vsub.s32 0, %v1266
          %v1268 = vrot.slane %v1263, %v1267
          %v1269 = vlaneseq
          %v1270 = vshrl.u32 %v1269, 7
          %v1271 = vsub.s32 1, %v1270
          %v1272 = vrot.slane %v1263, %v1271
          %v1275 = vadd.f32 %v1231, %v1268
          %v1276 = vadd.f32 %v1232, %v1272
          %v1277 = vadd.f32 %v1233, %v1268
          %v1278 = vadd.f32 %v1234, %v1272
          %v1279 = vadd.f32 %v1235, %v1268
          %v1280 = vadd.f32 %v1236, %v1272
          %v1281 = vadd.f32 %v1237, %v1268
          %v1282 = vadd.f32 %v1238, %v1272
          %v1283 = vadd.f32 %v1239, %v1268
          %v1284 = vadd.f32 %v1240, %v1272
          %v1285 = vadd.f32 %v1241, %v1268
          %v1286 = vadd.f32 %v1242, %v1272
          %v1287 = vadd.f32 %v1243, %v1268
          %v1288 = vadd.f32 %v1244, %v1272
          %v1289 = vadd.f32 %v1245, %v1268
          %v1290 = vadd.f32 %v1246, %v1272
          %v1291 = vadd.f32 %v1247, %v1268
          %v1292 = vadd.f32 %v1248, %v1272
          %v1293 = vadd.f32 %v1249, %v1268
          %v1294 = vadd.f32 %v1250, %v1272
          %v1295 = vadd.f32 %v1251, %v1268
          %v1296 = vadd.f32 %v1252, %v1272
          %v1297 = vadd.f32 %v1253, %v1268
          %v1298 = vadd.f32 %v1254, %v1272
          %v1299 = vadd.f32 %v1255, %v1268
          %v1300 = vadd.f32 %v1256, %v1272
          %v1301 = vadd.f32 %v1257, %v1268
          %v1302 = vadd.f32 %v1258, %v1272
          %v1303 = vadd.f32 %v1259, %v1268
          %v1304 = vadd.f32 %v1260, %v1272
          %v1305 = vadd.f32 %v1261, %v1268
          %v1306 = vadd.f32 %v1262, %v1272
          %v1307 = vmax.f32 %v1275, 0.0
          %v1308 = vmax.f32 %v1276, 0.0
          %v1309 = vmax.f32 %v1277, 0.0
          %v1310 = vmax.f32 %v1278, 0.0
          %v1311 = vmax.f32 %v1279, 0.0
          %v1312 = vmax.f32 %v1280, 0.0
          %v1313 = vmax.f32 %v1281, 0.0
          %v1314 = vmax.f32 %v1282, 0.0
          %v1315 = vmax.f32 %v1283, 0.0
          %v1316 = vmax.f32 %v1284, 0.0
          %v1317 = vmax.f32 %v1285, 0.0
          %v1318 = vmax.f32 %v1286, 0.0
          %v1319 = vmax.f32 %v1287, 0.0
          %v1320 = vmax.f32 %v1288, 0.0
          %v1321 = vmax.f32 %v1289, 0.0
          %v1322 = vmax.f32 %v1290, 0.0
          %v1323 = vmax.f32 %v1291, 0.0
          %v1324 = vmax.f32 %v1292, 0.0
          %v1325 = vmax.f32 %v1293, 0.0
          %v1326 = vmax.f32 %v1294, 0.0
          %v1327 = vmax.f32 %v1295, 0.0
          %v1328 = vmax.f32 %v1296, 0.0
          %v1329 = vmax.f32 %v1297, 0.0
          %v1330 = vmax.f32 %v1298, 0.0
          %v1331 = vmax.f32 %v1299, 0.0
          %v1332 = vmax.f32 %v1300, 0.0
          %v1333 = vmax.f32 %v1301, 0.0
          %v1334 = vmax.f32 %v1302, 0.0
          %v1335 = vmax.f32 %v1303, 0.0
          %v1336 = vmax.f32 %v1304, 0.0
          %v1337 = vmax.f32 %v1305, 0.0
          %v1338 = vmax.f32 %v1306, 0.0
          %v1339 = vpack.c.bf16 %v1309, %v1307
          %v1340 = vpack.c.bf16 %v1310, %v1308
          %v1341 = vpack.c.bf16 %v1313, %v1311
          %v1342 = vpack.c.bf16 %v1314, %v1312
          %v1343 = vpack.c.bf16 %v1317, %v1315
          %v1344 = vpack.c.bf16 %v1318, %v1316
          %v1345 = vpack.c.bf16 %v1321, %v1319
          %v1346 = vpack.c.bf16 %v1322, %v1320
          %v1347 = vpack.c.bf16 %v1325, %v1323
          %v1348 = vpack.c.bf16 %v1326, %v1324
          %v1349 = vpack.c.bf16 %v1329, %v1327
          %v1350 = vpack.c.bf16 %v1330, %v1328
          %v1351 = vpack.c.bf16 %v1333, %v1331
          %v1352 = vpack.c.bf16 %v1334, %v1332
          %v1353 = vpack.c.bf16 %v1337, %v1335
          %v1354 = vpack.c.bf16 %v1338, %v1336
          %v1355 = vld [vmem:[#allocation8] sm:$0xf]
          %v1356 = vld [vmem:[#allocation8 + $0x4] sm:$0xf]
          %v1357 = vld [vmem:[#allocation8 + $0x8] sm:$0xf]
          %v1358 = vld [vmem:[#allocation8 + $0xc] sm:$0xf]
          %v1359 = vld [vmem:[#allocation8 + $0x10] sm:$0xf]
          %v1360 = vld [vmem:[#allocation8 + $0x14] sm:$0xf]
          %v1361 = vld [vmem:[#allocation8 + $0x18] sm:$0xf]
          %v1362 = vld [vmem:[#allocation8 + $0x1c] sm:$0xf]
          %v1363 = vld [vmem:[#allocation8 + $0x20] sm:$0xf]
          %v1364 = vld [vmem:[#allocation8 + $0x24] sm:$0xf]
          %v1365 = vld [vmem:[#allocation8 + $0x28] sm:$0xf]
          %v1366 = vld [vmem:[#allocation8 + $0x2c] sm:$0xf]
          %v1367 = vld [vmem:[#allocation8 + $0x30] sm:$0xf]
          %v1368 = vld [vmem:[#allocation8 + $0x34] sm:$0xf]
          %v1369 = vld [vmem:[#allocation8 + $0x38] sm:$0xf]
          %v1370 = vld [vmem:[#allocation8 + $0x3c] sm:$0xf]
          %v1371 = vld [vmem:[#allocation8 + $0x40] sm:$0xf]
          %v1372 = vld [vmem:[#allocation8 + $0x44] sm:$0xf]
          %v1373 = vld [vmem:[#allocation8 + $0x48] sm:$0xf]
          %v1374 = vld [vmem:[#allocation8 + $0x4c] sm:$0xf]
          %v1375 = vld [vmem:[#allocation8 + $0x50] sm:$0xf]
          %v1376 = vld [vmem:[#allocation8 + $0x54] sm:$0xf]
          %v1377 = vld [vmem:[#allocation8 + $0x58] sm:$0xf]
          %v1378 = vld [vmem:[#allocation8 + $0x5c] sm:$0xf]
          %v1379 = vld [vmem:[#allocation8 + $0x60] sm:$0xf]
          %v1380 = vld [vmem:[#allocation8 + $0x64] sm:$0xf]
          %v1381 = vld [vmem:[#allocation8 + $0x68] sm:$0xf]
          %v1382 = vld [vmem:[#allocation8 + $0x6c] sm:$0xf]
          %v1383 = vld [vmem:[#allocation8 + $0x70] sm:$0xf]
          %v1384 = vld [vmem:[#allocation8 + $0x74] sm:$0xf]
          %v1385 = vld [vmem:[#allocation8 + $0x78] sm:$0xf]
          %v1386 = vld [vmem:[#allocation8 + $0x7c] sm:$0xf]
          %v1387 = vld [vmem:[%s4] sm:$0x1]
          %v1389 = vlaneseq
          %v1390 = vshrl.u32 %v1389, 7
          %v1391 = vsub.s32 0, %v1390
          %v1392 = vrot.slane %v1387, %v1391
          %v1426 = vunpack.c.l.b16 %v1355
          %v1427 = vunpack.c.l.b16 %v1356
          %v1428 = vunpack.c.l.b16 %v1357
          %v1429 = vunpack.c.l.b16 %v1358
          %v1430 = vunpack.c.l.b16 %v1359
          %v1431 = vunpack.c.l.b16 %v1360
          %v1432 = vunpack.c.l.b16 %v1361
          %v1433 = vunpack.c.l.b16 %v1362
          %v1434 = vunpack.c.l.b16 %v1363
          %v1435 = vunpack.c.l.b16 %v1364
          %v1436 = vunpack.c.l.b16 %v1365
          %v1437 = vunpack.c.l.b16 %v1366
          %v1438 = vunpack.c.l.b16 %v1367
          %v1439 = vunpack.c.l.b16 %v1368
          %v1440 = vunpack.c.l.b16 %v1369
          %v1441 = vunpack.c.l.b16 %v1370
          %v1442 = vunpack.c.l.b16 %v1371
          %v1443 = vunpack.c.l.b16 %v1372
          %v1444 = vunpack.c.l.b16 %v1373
          %v1445 = vunpack.c.l.b16 %v1374
          %v1446 = vunpack.c.l.b16 %v1375
          %v1447 = vunpack.c.l.b16 %v1376
          %v1448 = vunpack.c.l.b16 %v1377
          %v1449 = vunpack.c.l.b16 %v1378
          %v1450 = vunpack.c.l.b16 %v1379
          %v1451 = vunpack.c.l.b16 %v1380
          %v1452 = vunpack.c.l.b16 %v1381
          %v1453 = vunpack.c.l.b16 %v1382
          %v1454 = vunpack.c.l.b16 %v1383
          %v1455 = vunpack.c.l.b16 %v1384
          %v1456 = vunpack.c.l.b16 %v1385
          %v1457 = vunpack.c.l.b16 %v1386
          %v1458 = vpack.c.b16 %v1427, %v1426
          %v1459 = vpack.c.b16 %v1429, %v1428
          %v1460 = vpack.c.b16 %v1431, %v1430
          %v1461 = vpack.c.b16 %v1433, %v1432
          %v1462 = vpack.c.b16 %v1435, %v1434
          %v1463 = vpack.c.b16 %v1437, %v1436
          %v1464 = vpack.c.b16 %v1439, %v1438
          %v1465 = vpack.c.b16 %v1441, %v1440
          %v1466 = vpack.c.b16 %v1443, %v1442
          %v1467 = vpack.c.b16 %v1445, %v1444
          %v1468 = vpack.c.b16 %v1447, %v1446
          %v1469 = vpack.c.b16 %v1449, %v1448
          %v1470 = vpack.c.b16 %v1451, %v1450
          %v1471 = vpack.c.b16 %v1453, %v1452
          %v1472 = vpack.c.b16 %v1455, %v1454
          %v1473 = vpack.c.b16 %v1457, %v1456
          %1490 = vmatprep.subr.bf16.mxu0 0
          %1491 = vmatpush1.bf16.msra.mxu0 %v1458
          %1492 = vmatprep.subr.bf16.mxu0 0
          %1493 = vmatpush1.bf16.msra.mxu0 %v1459
          %1494 = vmatprep.subr.bf16.mxu0 0
          %1495 = vmatpush1.bf16.msra.mxu0 %v1460
          %1496 = vmatprep.subr.bf16.mxu0 0
          %1497 = vmatpush1.bf16.msra.mxu0 %v1461
          %1498 = vmatprep.subr.bf16.mxu0 0
          %1499 = vmatpush1.bf16.msra.mxu0 %v1462
          %1500 = vmatprep.subr.bf16.mxu0 0
          %1501 = vmatpush1.bf16.msra.mxu0 %v1463
          %1502 = vmatprep.subr.bf16.mxu0 0
          %1503 = vmatpush1.bf16.msra.mxu0 %v1464
          %1504 = vmatprep.subr.bf16.mxu0 0
          %1505 = vmatpush1.bf16.msra.mxu0 %v1465
          %1506 = vmatprep.subr.bf16.mxu0 0
          %1507 = vmatpush1.bf16.msra.mxu0 %v1466
          %1508 = vmatprep.subr.bf16.mxu0 0
          %1509 = vmatpush1.bf16.msra.mxu0 %v1467
          %1510 = vmatprep.subr.bf16.mxu0 0
          %1511 = vmatpush1.bf16.msra.mxu0 %v1468
          %1512 = vmatprep.subr.bf16.mxu0 0
          %1513 = vmatpush1.bf16.msra.mxu0 %v1469
          %1514 = vmatprep.subr.bf16.mxu0 0
          %1515 = vmatpush1.bf16.msra.mxu0 %v1470
          %1516 = vmatprep.subr.bf16.mxu0 0
          %1517 = vmatpush1.bf16.msra.mxu0 %v1471
          %1518 = vmatprep.subr.bf16.mxu0 0
          %1519 = vmatpush1.bf16.msra.mxu0 %v1472
          %1520 = vmatprep.subr.bf16.mxu0 0
          %1521 = vmatpush1.bf16.msra.mxu0 %v1473
          %1522 = vmatprep.mubr.bf16.mxu0 %v1340
          %1523 = vmatmul.mubr.bf16.gmra.mrb[0].mxu0 %v1339
          %v1524 = vpop.f32.mrb[0].mxu0
          %v1525 = vadd.f32 %v1392, %v1524
          %v1526 = vpop.f32.mrb[0].mxu0
          %v1527 = vpop.f32.mrb[0].mxu0
          %v1528 = vadd.f32 %v1392, %v1527
          %v1529 = vpop.f32.mrb[0].mxu0
          %1530 = vmatprep.mubr.bf16.mxu0 %v1342
          %1531 = vmatmul.mubr.bf16.gmra.mrb[0].mxu0 %v1341
          %v1532 = vpop.f32.mrb[0].mxu0
          %v1533 = vadd.f32 %v1392, %v1532
          %v1534 = vpop.f32.mrb[0].mxu0
          %v1535 = vpop.f32.mrb[0].mxu0
          %v1536 = vadd.f32 %v1392, %v1535
          %v1537 = vpop.f32.mrb[0].mxu0
          %1538 = vmatprep.mubr.bf16.mxu0 %v1344
          %1539 = vmatmul.mubr.bf16.gmra.mrb[0].mxu0 %v1343
          %v1540 = vpop.f32.mrb[0].mxu0
          %v1541 = vadd.f32 %v1392, %v1540
          %v1542 = vpop.f32.mrb[0].mxu0
          %v1543 = vpop.f32.mrb[0].mxu0
          %v1544 = vadd.f32 %v1392, %v1543
          %v1545 = vpop.f32.mrb[0].mxu0
          %1546 = vmatprep.mubr.bf16.mxu0 %v1346
          %1547 = vmatmul.mubr.bf16.gmra.mrb[0].mxu0 %v1345
          %v1548 = vpop.f32.mrb[0].mxu0
          %v1549 = vadd.f32 %v1392, %v1548
          %v1550 = vpop.f32.mrb[0].mxu0
          %v1551 = vpop.f32.mrb[0].mxu0
          %v1552 = vadd.f32 %v1392, %v1551
          %v1553 = vpop.f32.mrb[0].mxu0
          %1554 = vmatprep.mubr.bf16.mxu0 %v1348
          %1555 = vmatmul.mubr.bf16.gmra.mrb[0].mxu0 %v1347
          %v1556 = vpop.f32.mrb[0].mxu0
          %v1557 = vadd.f32 %v1392, %v1556
          %v1558 = vpop.f32.mrb[0].mxu0
          %v1559 = vpop.f32.mrb[0].mxu0
          %v1560 = vadd.f32 %v1392, %v1559
          %v1561 = vpop.f32.mrb[0].mxu0
          %1562 = vmatprep.mubr.bf16.mxu0 %v1350
          %1563 = vmatmul.mubr.bf16.gmra.mrb[0].mxu0 %v1349
          %v1564 = vpop.f32.mrb[0].mxu0
          %v1565 = vadd.f32 %v1392, %v1564
          %v1566 = vpop.f32.mrb[0].mxu0
          %v1567 = vpop.f32.mrb[0].mxu0
          %v1568 = vadd.f32 %v1392, %v1567
          %v1569 = vpop.f32.mrb[0].mxu0
          %1570 = vmatprep.mubr.bf16.mxu0 %v1352
          %1571 = vmatmul.mubr.bf16.gmra.mrb[0].mxu0 %v1351
          %v1572 = vpop.f32.mrb[0].mxu0
          %v1573 = vadd.f32 %v1392, %v1572
          %v1574 = vpop.f32.mrb[0].mxu0
          %v1575 = vpop.f32.mrb[0].mxu0
          %v1576 = vadd.f32 %v1392, %v1575
          %v1577 = vpop.f32.mrb[0].mxu0
          %1578 = vmatprep.mubr.bf16.mxu0 %v1354
          %1579 = vmatmul.mubr.bf16.gmra.mrb[0].mxu0 %v1353
          %v1580 = vpop.f32.mrb[0].mxu0
          %v1581 = vadd.f32 %v1392, %v1580
          %v1582 = vpop.f32.mrb[0].mxu0
          %v1583 = vpop.f32.mrb[0].mxu0
          %v1584 = vadd.f32 %v1392, %v1583
          %v1585 = vpop.f32.mrb[0].mxu0
          %1586 = vdwg.mxu0
          %v1587 = vmax.f32 %v1525, 0.0
          %v1588 = vmax.f32 %v1528, 0.0
          %v1589 = vmax.f32 %v1533, 0.0
          %v1590 = vmax.f32 %v1536, 0.0
          %v1591 = vmax.f32 %v1541, 0.0
          %v1592 = vmax.f32 %v1544, 0.0
          %v1593 = vmax.f32 %v1549, 0.0
          %v1594 = vmax.f32 %v1552, 0.0
          %v1595 = vmax.f32 %v1557, 0.0
          %v1596 = vmax.f32 %v1560, 0.0
          %v1597 = vmax.f32 %v1565, 0.0
          %v1598 = vmax.f32 %v1568, 0.0
          %v1599 = vmax.f32 %v1573, 0.0
          %v1600 = vmax.f32 %v1576, 0.0
          %v1601 = vmax.f32 %v1581, 0.0
          %v1602 = vmax.f32 %v1584, 0.0
          %v1603 = vpack.c.bf16 %v1588, %v1587
          %v1604 = vpack.c.bf16 %v1590, %v1589
          %v1605 = vpack.c.bf16 %v1592, %v1591
          %v1606 = vpack.c.bf16 %v1594, %v1593
          %v1607 = vpack.c.bf16 %v1596, %v1595
          %v1608 = vpack.c.bf16 %v1598, %v1597
          %v1609 = vpack.c.bf16 %v1600, %v1599
          %v1610 = vpack.c.bf16 %v1602, %v1601
          %v1611 = vld [vmem:[#allocation9] sm:$0xf]
          %v1612 = vld [vmem:[#allocation9 + $0x4] sm:$0xf]
          %v1613 = vld [vmem:[#allocation9 + $0x8] sm:$0xf]
          %v1614 = vld [vmem:[#allocation9 + $0xc] sm:$0xf]
          %v1615 = vld [vmem:[#allocation9 + $0x10] sm:$0xf]
          %v1616 = vld [vmem:[#allocation9 + $0x14] sm:$0xf]
          %v1617 = vld [vmem:[#allocation9 + $0x18] sm:$0xf]
          %v1618 = vld [vmem:[#allocation9 + $0x1c] sm:$0xf]
          %v1619 = vld [vmem:[#allocation9 + $0x20] sm:$0xf]
          %v1620 = vld [vmem:[#allocation9 + $0x24] sm:$0xf]
          %v1621 = vld [vmem:[#allocation9 + $0x28] sm:$0xf]
          %v1622 = vld [vmem:[#allocation9 + $0x2c] sm:$0xf]
          %v1623 = vld [vmem:[#allocation9 + $0x30] sm:$0xf]
          %v1624 = vld [vmem:[#allocation9 + $0x34] sm:$0xf]
          %v1625 = vld [vmem:[#allocation9 + $0x38] sm:$0xf]
          %v1626 = vld [vmem:[#allocation9 + $0x3c] sm:$0xf]
          %v1627 = vld [vmem:[%s6] sm:$0x1]
          %v1629 = vlaneseq
          %v1630 = vshrl.u32 %v1629, 7
          %v1631 = vsub.s32 0, %v1630
          %v1632 = vrot.slane %v1627, %v1631
          %v1650 = vunpack.c.l.b16 %v1611
          %v1651 = vunpack.c.l.b16 %v1612
          %v1652 = vunpack.c.l.b16 %v1613
          %v1653 = vunpack.c.l.b16 %v1614
          %v1654 = vunpack.c.l.b16 %v1615
          %v1655 = vunpack.c.l.b16 %v1616
          %v1656 = vunpack.c.l.b16 %v1617
          %v1657 = vunpack.c.l.b16 %v1618
          %v1658 = vunpack.c.l.b16 %v1619
          %v1659 = vunpack.c.l.b16 %v1620
          %v1660 = vunpack.c.l.b16 %v1621
          %v1661 = vunpack.c.l.b16 %v1622
          %v1662 = vunpack.c.l.b16 %v1623
          %v1663 = vunpack.c.l.b16 %v1624
          %v1664 = vunpack.c.l.b16 %v1625
          %v1665 = vunpack.c.l.b16 %v1626
          %v1666 = vpack.c.b16 %v1651, %v1650
          %v1667 = vpack.c.b16 %v1653, %v1652
          %v1668 = vpack.c.b16 %v1655, %v1654
          %v1669 = vpack.c.b16 %v1657, %v1656
          %v1670 = vpack.c.b16 %v1659, %v1658
          %v1671 = vpack.c.b16 %v1661, %v1660
          %v1672 = vpack.c.b16 %v1663, %v1662
          %v1673 = vpack.c.b16 %v1665, %v1664
          %1682 = vmatprep.subr.bf16.mxu0 0
          %1683 = vmatpush1.bf16.msra.mxu0 %v1666
          %1684 = vmatprep.subr.bf16.mxu0 0
          %1685 = vmatpush1.bf16.msra.mxu0 %v1667
          %1686 = vmatprep.subr.bf16.mxu0 0
          %1687 = vmatpush1.bf16.msra.mxu0 %v1668
          %1688 = vmatprep.subr.bf16.mxu0 0
          %1689 = vmatpush1.bf16.msra.mxu0 %v1669
          %1690 = vmatprep.subr.bf16.mxu0 0
          %1691 = vmatpush1.bf16.msra.mxu0 %v1670
          %1692 = vmatprep.subr.bf16.mxu0 0
          %1693 = vmatpush1.bf16.msra.mxu0 %v1671
          %1694 = vmatprep.subr.bf16.mxu0 0
          %1695 = vmatpush1.bf16.msra.mxu0 %v1672
          %1696 = vmatprep.subr.bf16.mxu0 0
          %1697 = vmatpush1.bf16.msra.mxu0 %v1673
          %1698 = vmatprep.subr.bf16.mxu0 0
          %1699 = vmatpush1.bf16.msra.mxu0 0
          %1700 = vmatprep.subr.bf16.mxu0 0
          %1701 = vmatpush1.bf16.msra.mxu0 0
          %1702 = vmatprep.subr.bf16.mxu0 0
          %1703 = vmatpush1.bf16.msra.mxu0 0
          %1704 = vmatprep.subr.bf16.mxu0 0
          %1705 = vmatpush1.bf16.msra.mxu0 0
          %1706 = vmatprep.subr.bf16.mxu0 0
          %1707 = vmatpush1.bf16.msra.mxu0 0
          %1708 = vmatprep.subr.bf16.mxu0 0
          %1709 = vmatpush1.bf16.msra.mxu0 0
          %1710 = vmatprep.subr.bf16.mxu0 0
          %1711 = vmatpush1.bf16.msra.mxu0 0
          %1712 = vmatprep.subr.bf16.mxu0 0
          %1713 = vmatpush1.bf16.msra.mxu0 0
          %1714 = vmatprep.mubr.bf16.mxu0 0
          %1715 = vmatmul.mubr.bf16.gmra.mrb[0].mxu0 %v1603
          %v1716 = vpop.f32.mrb[0].mxu0
          %v1717 = vadd.f32 %v1632, %v1716
          %v1718 = vpop.f32.mrb[0].mxu0
          %v1719 = vpop.f32.mrb[0].mxu0
          %v1720 = vadd.f32 %v1632, %v1719
          %v1721 = vpop.f32.mrb[0].mxu0
          %1722 = vmatprep.mubr.bf16.mxu0 0
          %1723 = vmatmul.mubr.bf16.gmra.mrb[0].mxu0 %v1604
          %v1724 = vpop.f32.mrb[0].mxu0
          %v1725 = vadd.f32 %v1632, %v1724
          %v1726 = vpop.f32.mrb[0].mxu0
          %v1727 = vpop.f32.mrb[0].mxu0
          %v1728 = vadd.f32 %v1632, %v1727
          %v1729 = vpop.f32.mrb[0].mxu0
          %1730 = vmatprep.mubr.bf16.mxu0 0
          %1731 = vmatmul.mubr.bf16.gmra.mrb[0].mxu0 %v1605
          %v1732 = vpop.f32.mrb[0].mxu0
          %v1733 = vadd.f32 %v1632, %v1732
          %v1734 = vpop.f32.mrb[0].mxu0
          %v1735 = vpop.f32.mrb[0].mxu0
          %v1736 = vadd.f32 %v1632, %v1735
          %v1737 = vpop.f32.mrb[0].mxu0
          %1738 = vmatprep.mubr.bf16.mxu0 0
          %1739 = vmatmul.mubr.bf16.gmra.mrb[0].mxu0 %v1606
          %v1740 = vpop.f32.mrb[0].mxu0
          %v1741 = vadd.f32 %v1632, %v1740
          %v1742 = vpop.f32.mrb[0].mxu0
          %v1743 = vpop.f32.mrb[0].mxu0
          %v1744 = vadd.f32 %v1632, %v1743
          %v1745 = vpop.f32.mrb[0].mxu0
          %1746 = vmatprep.mubr.bf16.mxu0 0
          %1747 = vmatmul.mubr.bf16.gmra.mrb[0].mxu0 %v1607
          %v1748 = vpop.f32.mrb[0].mxu0
          %v1749 = vadd.f32 %v1632, %v1748
          %v1750 = vpop.f32.mrb[0].mxu0
          %v1751 = vpop.f32.mrb[0].mxu0
          %v1752 = vadd.f32 %v1632, %v1751
          %v1753 = vpop.f32.mrb[0].mxu0
          %1754 = vmatprep.mubr.bf16.mxu0 0
          %1755 = vmatmul.mubr.bf16.gmra.mrb[0].mxu0 %v1608
          %v1756 = vpop.f32.mrb[0].mxu0
          %v1757 = vadd.f32 %v1632, %v1756
          %v1758 = vpop.f32.mrb[0].mxu0
          %v1759 = vpop.f32.mrb[0].mxu0
          %v1760 = vadd.f32 %v1632, %v1759
          %v1761 = vpop.f32.mrb[0].mxu0
          %1762 = vmatprep.mubr.bf16.mxu0 0
          %1763 = vmatmul.mubr.bf16.gmra.mrb[0].mxu0 %v1609
          %v1764 = vpop.f32.mrb[0].mxu0
          %v1765 = vadd.f32 %v1632, %v1764
          %v1766 = vpop.f32.mrb[0].mxu0
          %v1767 = vpop.f32.mrb[0].mxu0
          %v1768 = vadd.f32 %v1632, %v1767
          %v1769 = vpop.f32.mrb[0].mxu0
          %1770 = vmatprep.mubr.bf16.mxu0 0
          %1771 = vmatmul.mubr.bf16.gmra.mrb[0].mxu0 %v1610
          %v1772 = vpop.f32.mrb[0].mxu0
          %v1773 = vadd.f32 %v1632, %v1772
          %v1774 = vpop.f32.mrb[0].mxu0
          %v1775 = vpop.f32.mrb[0].mxu0
          %v1776 = vadd.f32 %v1632, %v1775
          %v1777 = vpop.f32.mrb[0].mxu0
          %1778 = vdwg.mxu0
          %1779 = vst [vmem:[%s383] sm:$0xff] %v1717
          %1780 = vst [vmem:[%s383 + $0x8] sm:$0xff] %v1720
          %1781 = vst [vmem:[%s383 + $0x10] sm:$0xff] %v1725
          %1782 = vst [vmem:[%s383 + $0x18] sm:$0xff] %v1728
          %1783 = vst [vmem:[%s383 + $0x20] sm:$0xff] %v1733
          %1784 = vst [vmem:[%s383 + $0x28] sm:$0xff] %v1736
          %1785 = vst [vmem:[%s383 + $0x30] sm:$0xff] %v1741
          %1786 = vst [vmem:[%s383 + $0x38] sm:$0xff] %v1744
          %1787 = vst [vmem:[%s383 + $0x40] sm:$0xff] %v1749
          %1788 = vst [vmem:[%s383 + $0x48] sm:$0xff] %v1752
          %1789 = vst [vmem:[%s383 + $0x50] sm:$0xff] %v1757
          %1790 = vst [vmem:[%s383 + $0x58] sm:$0xff] %v1760
          %1791 = vst [vmem:[%s383 + $0x60] sm:$0xff] %v1765
          %1792 = vst [vmem:[%s383 + $0x68] sm:$0xff] %v1768
          %1793 = vst [vmem:[%s383 + $0x70] sm:$0xff] %v1773
          %1794 = vst [vmem:[%s383 + $0x78] sm:$0xff] %v1776
        $region72: #{tpu_custom_call.1} parent=47 // pred_fallthru
          _
        %s1795 = sand.u32 %s207, 1
        %s1796 = scalar_lea.sflag [#allocation5], %s1795
        %s1797 = sand.u32 %s207, 1
        %s1798 = smul.addr %s1797, 128
        %s1799 = scalar_lea.vmem [#allocation11], %s1798
        // Predicated region
        $region73: #{tpu_custom_call.1} parent=47 // pred_check
          %p1800 = pneg %p217
        $region74: #{tpu_custom_call.1} parent=47 // pred_check_branch
          %1802 = sbr.rel (%p1800) target = $region76
        $region75: #{tpu_custom_call.1} parent=47 // pred_region
          %s1803 = smul.u32 16, %s32
          %s1805 = ssub.s32 2048, 2048
          %1806 = vsyncadd %s1796, %s1805
          %s1807 = smul.addr %s1803, 128
          %s1808 = scalar_lea.hbm %s7, %s1807
          %s1809 = sshll.u32 %s1799, 4
          %s1810 = int_to_ptr.vmem [resolvable:$true] %s1809
          %1815 = dma.vmem_to_hbm [thread:$0]  %s1810, 2048, %s1808, %s1796, 128, 128, 8
        $region76: #{tpu_custom_call.1} parent=47 // pred_fallthru
          _
      $region48: #{tpu_custom_call.1} parent=5 // pred_fallthru
        _
      %p1816 = scmp.le.s32.totalorder 2, %s23
      // Predicated region
      $region77: #{tpu_custom_call.1} parent=5 // pred_check
        %p1817 = pneg %p1816
      $region78: #{tpu_custom_call.1} parent=5 // pred_check_branch
        %1819 = sbr.rel (%p1817) target = $region80
      $region79: #{tpu_custom_call.1} parent=5 // pred_region
        %s1820 = ssub.s32 %s23, 2
        // Predicated region
        $region81: #{tpu_custom_call.1} parent=79 // pred_check
          %p1821 = pneg %p223
        $region82: #{tpu_custom_call.1} parent=79 // pred_check_branch
          %1823 = sbr.rel (%p1821) target = $region84
        $region83: #{tpu_custom_call.1} parent=79 // pred_region
          %s1824 = sand.u32 %s208, 1
          %s1825 = scalar_lea.sflag [#allocation5], %s1824
          %s1826 = sand.u32 %s208, 1
          %s1827 = smul.addr %s1826, 128
          %s1828 = scalar_lea.vmem [#allocation11], %s1827
          %1829 = dma.done %s1825, 2048
        $region84: #{tpu_custom_call.1} parent=79 // pred_fallthru
          _
      $region80: #{tpu_custom_call.1} parent=5 // pred_fallthru
        _
    $region6: #{tpu_custom_call.1} parent=1 // loop_footer
      %s27 = sadd.s32 1, %s23
    $region7: #{tpu_custom_call.1} parent=1 // loop_footer_branch
      %22 = sbr.rel target = $region3
    $region8: #{tpu_custom_call.1} parent=1 // loop_exit
      _
    %1830 = vsyncpa [#allocation4], 1
    %s1831 = scalar_lea.sflag [#allocation4], 1
    %1832 = vsyncpa %s1831, 1
    %1833 = vsyncpa [#allocation7], 1
    %s1834 = scalar_lea.sflag [#allocation7], 1
    %1835 = vsyncpa %s1834, 1
    %1836 = vsyncpa [#allocation10], 1
    %1837 = vsyncpa [#allocation5], 1
    %s1838 = scalar_lea.sflag [#allocation5], 1
    %1839 = vsyncpa %s1838, 1

</llo_original>
